<compile_context>
chip_gen: v6e
topology: v6e:2x2x1
jax: 0.10.0
libtpu: 0.0.40
codegen_flags: <defaults>
</compile_context>

<pallas_src>
import functools

import jax
import jax.numpy as jnp
import numpy as np
from jax import lax
from jax.experimental import pallas as pl
from jax.experimental.pallas import tpu as pltpu

BN_EPS = 1e-5


# ----------------------------- Pallas kernel ------------------------------ #
def deepfm_kernel(idx_ref, w1f_ref, emb_ref, sc_ref,
                  b1_ref, w2_ref, b2_ref, w3_ref,
                  out_ref, *, num_fields, vocab):
    """One batch tile of DeepFM.

    idx_ref : (tb, F)   int32   per-field vocab indices (already offset)
    w1f_ref : (F*V, H1) cdt     emb_table @ W1_field, stacked per field (BN folded)
    emb_ref : (V, E)    cdt     embedding table (vocab padded to V)
    sc_ref  : (V, 2)    f32     col0 = ||emb[v]||^2, col1 = lin[v] + (lin_bias+b3)/F
    b1_ref  : (1, H1)   f32     BN-folded bias
    w2_ref  : (H1, H2)  cdt     BN-folded weight
    b2_ref  : (1, H2)   f32
    w3_ref  : (1, H2)   cdt     final linear as a row vector
    out_ref : (tb, 1)   f32     sigmoid(logits)
    """
    F, V = num_fields, vocab
    tb = idx_ref.shape[0]
    cdt = emb_ref.dtype

    ids = idx_ref[...]                                         # (tb, F) int32
    lane = lax.broadcasted_iota(jnp.int32, (tb, V), 1)

    # ---- fused gather via exact one-hot MXU lookups (F is small & static) ----
    oh = jnp.where(ids[:, 0:1] == lane, 1.0, 0.0).astype(cdt)  # (tb, V)
    multi_hot = oh
    acc_h = jnp.dot(oh, w1f_ref[0:V, :],
                    preferred_element_type=jnp.float32)        # (tb, H1) f32
    for f in range(1, F):
        oh = jnp.where(ids[:, f:f + 1] == lane, 1.0, 0.0).astype(cdt)
        multi_hot = multi_hot + oh
        acc_h = acc_h + jnp.dot(oh, w1f_ref[f * V:(f + 1) * V, :],
                                preferred_element_type=jnp.float32)

    # ---- FactorizationMachine + FeaturesLinear from the multi-hot row ----
    # (field offsets make indices disjoint, so multi_hot is 0/1 with F ones)
    sum_vec = jnp.dot(multi_hot, emb_ref[...],
                      preferred_element_type=jnp.float32)       # (tb, E) = sum_f e_f
    scal = jnp.dot(multi_hot.astype(jnp.float32), sc_ref[...],
                   preferred_element_type=jnp.float32)          # (tb, 2)
    sum_sq = scal[:, 0:1]                                       # sum_f ||e_f||^2
    lin = scal[:, 1:2]                                          # + lin_bias + b3 (folded)
    fm = 0.5 * (jnp.sum(sum_vec * sum_vec, axis=-1, keepdims=True) - sum_sq)

    # ---- MLP (BatchNorm folded into W/b; dropout = identity in eval mode) ----
    h = jnp.maximum(acc_h + b1_ref[...], 0.0)
    h = jnp.dot(h.astype(w2_ref.dtype), w2_ref[...],
                preferred_element_type=jnp.float32) + b2_ref[...]
    h = jnp.maximum(h, 0.0)
    # final (tb,H2)@(H2,1): N=1 matmul wastes the MXU -> VPU multiply + lane reduce
    mlp = jnp.sum(h * w3_ref[...].astype(jnp.float32), axis=-1, keepdims=True)

    out_ref[...] = jax.nn.sigmoid(fm + lin + mlp)               # (tb, 1)


def _pick_tb(batch, tb):
    # Clamp to the (128-padded) batch; on large batches keep >= ~8 grid steps
    # so the "parallel" grid axis still feeds both v7x TensorCores.
    tb = max(128, min(tb, pl.cdiv(batch, 128) * 128))
    if batch >= 8 * 512:
        tb = min(tb, max(512, (pl.cdiv(batch, 8) // 128) * 128))
    return tb


def deepfm_pallas(idx, fp, *, tb=1024):
    B, F = idx.shape
    V, E = fp["emb"].shape
    h1 = fp["w1f"].shape[1]
    h2 = fp["w2"].shape[1]

    tb = _pick_tb(B, tb)
    b_pad = pl.cdiv(B, tb) * tb
    if b_pad != B:
        idx = jnp.pad(idx, ((0, b_pad - B), (0, 0)))   # padded rows -> garbage, sliced off

    kernel = functools.partial(deepfm_kernel, num_fields=F, vocab=V)

    def resident(shape):
        # tables / weights / biases: same block every grid step -> VMEM-resident
        return pl.BlockSpec(shape, lambda i: (0, 0))

    out = pl.pallas_call(
        kernel,
        out_shape=jax.ShapeDtypeStruct((b_pad, 1), jnp.float32),
        grid=(b_pad // tb,),
        in_specs=[
            pl.BlockSpec((tb, F), lambda i: (i, 0)),   # indices, batch-tiled
            resident((F * V, h1)),                     # folded emb@W1 per field
            resident((V, E)),                          # embedding table
            resident((V, 2)),                          # [||e||^2, lin(+bias/F)]
            resident((1, h1)),                         # b1'
            resident((h1, h2)), resident((1, h2)),     # W2', b2'
            resident((1, h2)),                         # W3 row
        ],
        out_specs=pl.BlockSpec((tb, 1), lambda i: (i, 0)),
        compiler_params=pltpu.CompilerParams(
            dimension_semantics=("parallel",)),        # megacore on v7x
    )(idx, fp["w1f"], fp["emb"], fp["sc"], fp["b1"], fp["w2"], fp["b2"], fp["w3"])

    return out[:B, 0]                                  # == torch .squeeze(1)


# ------------------------------ JAX glue ---------------------------------- #
def make_params(key, feature_dims, embed_dim, hidden_dims):
    assert len(hidden_dims) == 2, "kernel is specialized for 2 hidden layers"
    total_vocab = int(sum(feature_dims))
    F = len(feature_dims)
    d_in = F * embed_dim
    keys = jax.random.split(key, 10)
    f32 = jnp.float32

    def bn_params(h):
        return (jnp.ones((1, h), f32), jnp.zeros((1, h), f32),
                jnp.zeros((1, h), f32), jnp.ones((1, h), f32))

    g1, be1, m1, v1 = bn_params(hidden_dims[0])
    g2, be2, m2, v2 = bn_params(hidden_dims[1])
    return {
        "embed_table": 0.1 * jax.random.normal(keys[0], (total_vocab, embed_dim), f32),
        "lin_table":   0.1 * jax.random.normal(keys[1], (total_vocab, 1), f32),
        "lin_bias":    jnp.zeros((1,), f32),
        "W1": 0.1 * jax.random.normal(keys[2], (d_in, hidden_dims[0]), f32),
        "b1": 0.1 * jax.random.normal(keys[3], (1, hidden_dims[0]), f32),
        "g1": g1, "be1": be1, "m1": m1, "v1": v1,
        "W2": 0.1 * jax.random.normal(keys[4], (hidden_dims[0], hidden_dims[1]), f32),
        "b2": 0.1 * jax.random.normal(keys[5], (1, hidden_dims[1]), f32),
        "g2": g2, "be2": be2, "m2": m2, "v2": v2,
        "W3": 0.1 * jax.random.normal(keys[6], (hidden_dims[1], 1), f32),
        "b3": 0.1 * jax.random.normal(keys[7], (1, 1), f32),
    }


def fold_params(p, feature_dims, embed_dim, compute_dtype=jnp.float32):
    """One-time fold: BN into W/b, vocab padding, emb@W1 per field, FM/lin table."""
    f32 = jnp.float32
    F = len(feature_dims)
    E = embed_dim
    total_vocab = int(sum(feature_dims))
    V = pl.cdiv(total_vocab, 128) * 128                 # lane/MXU-friendly vocab pad

    s1 = p["g1"] * lax.rsqrt(p["v1"] + BN_EPS)
    s2 = p["g2"] * lax.rsqrt(p["v2"] + BN_EPS)
    W1 = p["W1"] * s1                                   # (F*E, H1), BN folded
    b1 = (p["b1"] - p["m1"]) * s1 + p["be1"]
    W2 = p["W2"] * s2
    b2 = (p["b2"] - p["m2"]) * s2 + p["be2"]

    emb = jnp.zeros((V, E), f32).at[:total_vocab].set(p["embed_table"])
    lin = jnp.zeros((V, 1), f32).at[:total_vocab].set(p["lin_table"])

    emb_c = emb.astype(compute_dtype)                   # table as seen by the kernel
    emb_cf = emb_c.astype(f32)                          # keep FM terms consistent with it

    # emb_table @ W1_field, stacked per field: one-hot @ w1f == emb[idx_f] @ W1_field
    w1f = jnp.concatenate(
        [emb_cf @ W1[f * E:(f + 1) * E, :] for f in range(F)], axis=0)   # (F*V, H1)

    # col0: per-row squared norm (FM sum-of-squares); col1: linear weight with the
    # global bias (lin_bias + b3) folded in as bias/F (exactly F hits per example).
    sq = jnp.sum(emb_cf * emb_cf, axis=1, keepdims=True)                 # (V, 1)
    bias_per_hit = (p["lin_bias"][0] + p["b3"][0, 0]) / F
    sc = jnp.concatenate([sq, lin + bias_per_hit], axis=1)               # (V, 2) f32

    return {
        "emb": emb_c,
        "w1f": w1f.astype(compute_dtype),
        "sc": sc,
        "b1": b1, "b2": b2,
        "w2": W2.astype(compute_dtype),
        "w3": p["W3"].reshape(1, -1).astype(compute_dtype),
    }


def deepfm_forward(x_idx, params, feature_dims, embed_dim, *,
                   compute_dtype=jnp.float32, tb=1024):
    # x.long() + per-field offsets (FeaturesLinear / FeaturesEmbedding)
    offsets = jnp.asarray(
        np.concatenate([[0], np.cumsum(feature_dims)[:-1]]), jnp.int32)
    idx = x_idx.astype(jnp.int32) + offsets[None, :]          # (B, F)
    # one-time parameter fold (cache this in real use)
    fp = fold_params(params, feature_dims, embed_dim, compute_dtype)
    return deepfm_pallas(idx, fp, tb=tb)


def deepfm_reference(x_idx, params, feature_dims, embed_dim):
    offsets = jnp.asarray(
        np.concatenate([[0], np.cumsum(feature_dims)[:-1]]), jnp.int32)
    idx = x_idx.astype(jnp.int32) + offsets[None, :]
    e = params["embed_table"][idx]
    lin = jnp.sum(params["lin_table"][idx], axis=1) + params["lin_bias"]
    fm = 0.5 * jnp.sum(jnp.sum(e, 1) ** 2 - jnp.sum(e ** 2, 1), 1, keepdims=True)
    h = e.reshape(x_idx.shape[0], -1)
    h = h @ params["W1"] + params["b1"]
    h = (h - params["m1"]) / jnp.sqrt(params["v1"] + BN_EPS) * params["g1"] + params["be1"]
    h = jnp.maximum(h, 0.0)
    h = h @ params["W2"] + params["b2"]
    h = (h - params["m2"]) / jnp.sqrt(params["v2"] + BN_EPS) * params["g2"] + params["be2"]
    h = jnp.maximum(h, 0.0)
    mlp = h @ params["W3"] + params["b3"]
    return jax.nn.sigmoid((lin + fm + mlp)[:, 0])


# --------------------------------- main ------------------------------------ #
if __name__ == "__main__":
    feature_dims = [10, 20, 30, 40]          # 4 categorical fields
    embed_dim = 16
    hidden_dims = [32, 32]
    batch = 8

    key = jax.random.PRNGKey(0)
    pkey, xkey, xkey2 = jax.random.split(key, 3)
    params = make_params(pkey, feature_dims, embed_dim, hidden_dims)

    # deterministic categorical indices, one per field, in-range
    maxvals = jnp.asarray(feature_dims, jnp.int32)[None, :]
    x = (jax.random.randint(xkey, (batch, len(feature_dims)), 0, 10_000) % maxvals)

    ref = deepfm_reference(x, params, feature_dims, embed_dim)

    # f32 path
    out_f32 = deepfm_forward(x, params, feature_dims, embed_dim,
                             compute_dtype=jnp.float32, tb=1024)
    out_f32 = jax.block_until_ready(out_f32)
    assert out_f32.shape == (batch,)
    np.testing.assert_allclose(np.asarray(out_f32), np.asarray(ref),
                               rtol=1e-4, atol=1e-5)

    # bf16 compute path (v5e/v6e/v7x: halves resident weight bytes, full MXU rate)
    out_bf16 = deepfm_forward(x, params, feature_dims, embed_dim,
                              compute_dtype=jnp.bfloat16, tb=1024)
    out_bf16 = jax.block_until_ready(out_bf16)
    np.testing.assert_allclose(np.asarray(out_bf16), np.asarray(ref),
                               rtol=5e-2, atol=5e-2)

    # larger non-multiple batch exercises the batch-tiled grid + padding path
    batch2 = 2600
    x2 = (jax.random.randint(xkey2, (batch2, len(feature_dims)), 0, 10_000) % maxvals)
    ref2 = deepfm_reference(x2, params, feature_dims, embed_dim)
    out2 = jax.block_until_ready(
        deepfm_forward(x2, params, feature_dims, embed_dim,
                       compute_dtype=jnp.float32, tb=1024))
    np.testing.assert_allclose(np.asarray(out2), np.asarray(ref2),
                               rtol=1e-4, atol=1e-5)

    print("KERNEL_OK")
</pallas_src>

<mosaic_0001>
module attributes {stable_mosaic.version = 11 : i64} {
  func.func @deepfm_kernel(%arg0: i32, %arg1: memref<128x4xi32, #tpu.memory_space<vmem>>, %arg2: memref<512x32xf32, #tpu.memory_space<vmem>>, %arg3: memref<128x16xf32, #tpu.memory_space<vmem>>, %arg4: memref<128x2xf32, #tpu.memory_space<vmem>>, %arg5: memref<1x32xf32, #tpu.memory_space<vmem>>, %arg6: memref<32x32xf32, #tpu.memory_space<vmem>>, %arg7: memref<1x32xf32, #tpu.memory_space<vmem>>, %arg8: memref<1x32xf32, #tpu.memory_space<vmem>>, %arg9: memref<128x1xf32, #tpu.memory_space<vmem>>) attributes {dimension_semantics = [#tpu.dimension_semantics<parallel>], iteration_bounds = array<i64: 1>, scalar_prefetch = 0 : i64, scratch_operands = 0 : i64, tpu.core_type = #tpu.core_type<tc>, window_params = [{transform_indices = @transform_0, window_bounds = array<i64: 128, 4>}, {pipeline_mode = #tpu.pipeline_mode<synchronous>, transform_indices = @transform_1, window_bounds = array<i64: 512, 32>}, {pipeline_mode = #tpu.pipeline_mode<synchronous>, transform_indices = @transform_2, window_bounds = array<i64: 128, 16>}, {pipeline_mode = #tpu.pipeline_mode<synchronous>, transform_indices = @transform_3, window_bounds = array<i64: 128, 2>}, {pipeline_mode = #tpu.pipeline_mode<synchronous>, transform_indices = @transform_4, window_bounds = array<i64: 1, 32>}, {pipeline_mode = #tpu.pipeline_mode<synchronous>, transform_indices = @transform_5, window_bounds = array<i64: 32, 32>}, {pipeline_mode = #tpu.pipeline_mode<synchronous>, transform_indices = @transform_6, window_bounds = array<i64: 1, 32>}, {pipeline_mode = #tpu.pipeline_mode<synchronous>, transform_indices = @transform_7, window_bounds = array<i64: 1, 32>}, {transform_indices = @transform_8, window_bounds = array<i64: 128, 1>}]} {
    %c0 = arith.constant 0 : index
    %c0_0 = arith.constant 0 : index
    %0 = vector.load %arg1[%c0, %c0_0] : memref<128x4xi32, #tpu.memory_space<vmem>>, vector<128x4xi32>
    %1 = tpu.iota {dimensions = array<i32: 1>} : vector<128x128xi32>
    %2 = vector.extract_strided_slice %0 {offsets = [0, 0], sizes = [128, 1], strides = [1, 1]} : vector<128x4xi32> to vector<128x1xi32>
    %3 = vector.broadcast %2 : vector<128x1xi32> to vector<128x128xi32>
    %4 = arith.cmpi eq, %3, %1 : vector<128x128xi32>
    %cst = arith.constant 1.000000e+00 : f32
    %cst_1 = arith.constant 0.000000e+00 : f32
    %5 = vector.broadcast %cst : f32 to vector<128x128xf32>
    %6 = vector.broadcast %cst_1 : f32 to vector<128x128xf32>
    %7 = arith.select %4, %5, %6 : vector<128x128xi1>, vector<128x128xf32>
    %c0_2 = arith.constant 0 : index
    %c0_3 = arith.constant 0 : index
    %8 = vector.load %arg2[%c0_2, %c0_3] : memref<512x32xf32, #tpu.memory_space<vmem>>, vector<128x32xf32>
    %cst_4 = arith.constant dense<0.000000e+00> : vector<128x32xf32>
    %9 = tpu.matmul %7, %8, %cst_4 {dimension_numbers = #tpu.dot_dimension_numbers<[1], [0], [0], [1], [0, 0, 1, 1], [], []>} : vector<128x128xf32>, vector<128x32xf32>, vector<128x32xf32> -> vector<128x32xf32>
    %10 = vector.extract_strided_slice %0 {offsets = [0, 1], sizes = [128, 1], strides = [1, 1]} : vector<128x4xi32> to vector<128x1xi32>
    %11 = vector.broadcast %10 : vector<128x1xi32> to vector<128x128xi32>
    %12 = arith.cmpi eq, %11, %1 : vector<128x128xi32>
    %cst_5 = arith.constant 1.000000e+00 : f32
    %cst_6 = arith.constant 0.000000e+00 : f32
    %13 = vector.broadcast %cst_5 : f32 to vector<128x128xf32>
    %14 = vector.broadcast %cst_6 : f32 to vector<128x128xf32>
    %15 = arith.select %12, %13, %14 : vector<128x128xi1>, vector<128x128xf32>
    %16 = arith.addf %7, %15 : vector<128x128xf32>
    %c128 = arith.constant 128 : index
    %c0_7 = arith.constant 0 : index
    %17 = vector.load %arg2[%c128, %c0_7] : memref<512x32xf32, #tpu.memory_space<vmem>>, vector<128x32xf32>
    %cst_8 = arith.constant dense<0.000000e+00> : vector<128x32xf32>
    %18 = tpu.matmul %15, %17, %cst_8 {dimension_numbers = #tpu.dot_dimension_numbers<[1], [0], [0], [1], [0, 0, 1, 1], [], []>} : vector<128x128xf32>, vector<128x32xf32>, vector<128x32xf32> -> vector<128x32xf32>
    %19 = arith.addf %9, %18 : vector<128x32xf32>
    %20 = vector.extract_strided_slice %0 {offsets = [0, 2], sizes = [128, 1], strides = [1, 1]} : vector<128x4xi32> to vector<128x1xi32>
    %21 = vector.broadcast %20 : vector<128x1xi32> to vector<128x128xi32>
    %22 = arith.cmpi eq, %21, %1 : vector<128x128xi32>
    %cst_9 = arith.constant 1.000000e+00 : f32
    %cst_10 = arith.constant 0.000000e+00 : f32
    %23 = vector.broadcast %cst_9 : f32 to vector<128x128xf32>
    %24 = vector.broadcast %cst_10 : f32 to vector<128x128xf32>
    %25 = arith.select %22, %23, %24 : vector<128x128xi1>, vector<128x128xf32>
    %26 = arith.addf %16, %25 : vector<128x128xf32>
    %c256 = arith.constant 256 : index
    %c0_11 = arith.constant 0 : index
    %27 = vector.load %arg2[%c256, %c0_11] : memref<512x32xf32, #tpu.memory_space<vmem>>, vector<128x32xf32>
    %cst_12 = arith.constant dense<0.000000e+00> : vector<128x32xf32>
    %28 = tpu.matmul %25, %27, %cst_12 {dimension_numbers = #tpu.dot_dimension_numbers<[1], [0], [0], [1], [0, 0, 1, 1], [], []>} : vector<128x128xf32>, vector<128x32xf32>, vector<128x32xf32> -> vector<128x32xf32>
    %29 = arith.addf %19, %28 : vector<128x32xf32>
    %30 = vector.extract_strided_slice %0 {offsets = [0, 3], sizes = [128, 1], strides = [1, 1]} : vector<128x4xi32> to vector<128x1xi32>
    %31 = vector.broadcast %30 : vector<128x1xi32> to vector<128x128xi32>
    %32 = arith.cmpi eq, %31, %1 : vector<128x128xi32>
    %cst_13 = arith.constant 1.000000e+00 : f32
    %cst_14 = arith.constant 0.000000e+00 : f32
    %33 = vector.broadcast %cst_13 : f32 to vector<128x128xf32>
    %34 = vector.broadcast %cst_14 : f32 to vector<128x128xf32>
    %35 = arith.select %32, %33, %34 : vector<128x128xi1>, vector<128x128xf32>
    %36 = arith.addf %26, %35 : vector<128x128xf32>
    %c384 = arith.constant 384 : index
    %c0_15 = arith.constant 0 : index
    %37 = vector.load %arg2[%c384, %c0_15] : memref<512x32xf32, #tpu.memory_space<vmem>>, vector<128x32xf32>
    %cst_16 = arith.constant dense<0.000000e+00> : vector<128x32xf32>
    %38 = tpu.matmul %35, %37, %cst_16 {dimension_numbers = #tpu.dot_dimension_numbers<[1], [0], [0], [1], [0, 0, 1, 1], [], []>} : vector<128x128xf32>, vector<128x32xf32>, vector<128x32xf32> -> vector<128x32xf32>
    %39 = arith.addf %29, %38 : vector<128x32xf32>
    %c0_17 = arith.constant 0 : index
    %c0_18 = arith.constant 0 : index
    %40 = vector.load %arg3[%c0_17, %c0_18] : memref<128x16xf32, #tpu.memory_space<vmem>>, vector<128x16xf32>
    %cst_19 = arith.constant dense<0.000000e+00> : vector<128x16xf32>
    %41 = tpu.matmul %36, %40, %cst_19 {dimension_numbers = #tpu.dot_dimension_numbers<[1], [0], [0], [1], [0, 0, 1, 1], [], []>} : vector<128x128xf32>, vector<128x16xf32>, vector<128x16xf32> -> vector<128x16xf32>
    %c0_20 = arith.constant 0 : index
    %c0_21 = arith.constant 0 : index
    %42 = vector.load %arg4[%c0_20, %c0_21] : memref<128x2xf32, #tpu.memory_space<vmem>>, vector<128x2xf32>
    %cst_22 = arith.constant dense<0.000000e+00> : vector<128x2xf32>
    %43 = tpu.matmul %36, %42, %cst_22 {dimension_numbers = #tpu.dot_dimension_numbers<[1], [0], [0], [1], [0, 0, 1, 1], [], []>} : vector<128x128xf32>, vector<128x2xf32>, vector<128x2xf32> -> vector<128x2xf32>
    %44 = vector.extract_strided_slice %43 {offsets = [0, 0], sizes = [128, 1], strides = [1, 1]} : vector<128x2xf32> to vector<128x1xf32>
    %45 = vector.extract_strided_slice %43 {offsets = [0, 1], sizes = [128, 1], strides = [1, 1]} : vector<128x2xf32> to vector<128x1xf32>
    %46 = arith.mulf %41, %41 : vector<128x16xf32>
    %cst_23 = arith.constant dense<0.000000e+00> : vector<128xf32>
    %47 = vector.multi_reduction <add>, %46, %cst_23 [1] : vector<128x16xf32> to vector<128xf32>
    %48 = vector.shape_cast %47 : vector<128xf32> to vector<128x1xf32>
    %49 = arith.subf %48, %44 : vector<128x1xf32>
    %cst_24 = arith.constant 5.000000e-01 : f32
    %50 = vector.broadcast %cst_24 : f32 to vector<128x1xf32>
    %51 = arith.mulf %50, %49 : vector<128x1xf32>
    %c0_25 = arith.constant 0 : index
    %c0_26 = arith.constant 0 : index
    %52 = vector.load %arg5[%c0_25, %c0_26] : memref<1x32xf32, #tpu.memory_space<vmem>>, vector<1x32xf32>
    %53 = vector.broadcast %52 : vector<1x32xf32> to vector<128x32xf32>
    %54 = arith.addf %39, %53 : vector<128x32xf32>
    %cst_27 = arith.constant 0.000000e+00 : f32
    %55 = vector.broadcast %cst_27 : f32 to vector<128x32xf32>
    %56 = arith.maximumf %54, %55 : vector<128x32xf32>
    %c0_28 = arith.constant 0 : index
    %c0_29 = arith.constant 0 : index
    %57 = vector.load %arg6[%c0_28, %c0_29] : memref<32x32xf32, #tpu.memory_space<vmem>>, vector<32x32xf32>
    %cst_30 = arith.constant dense<0.000000e+00> : vector<128x32xf32>
    %58 = tpu.matmul %56, %57, %cst_30 {dimension_numbers = #tpu.dot_dimension_numbers<[1], [0], [0], [1], [0, 0, 1, 1], [], []>} : vector<128x32xf32>, vector<32x32xf32>, vector<128x32xf32> -> vector<128x32xf32>
    %c0_31 = arith.constant 0 : index
    %c0_32 = arith.constant 0 : index
    %59 = vector.load %arg7[%c0_31, %c0_32] : memref<1x32xf32, #tpu.memory_space<vmem>>, vector<1x32xf32>
    %60 = vector.broadcast %59 : vector<1x32xf32> to vector<128x32xf32>
    %61 = arith.addf %58, %60 : vector<128x32xf32>
    %cst_33 = arith.constant 0.000000e+00 : f32
    %62 = vector.broadcast %cst_33 : f32 to vector<128x32xf32>
    %63 = arith.maximumf %61, %62 : vector<128x32xf32>
    %c0_34 = arith.constant 0 : index
    %c0_35 = arith.constant 0 : index
    %64 = vector.load %arg8[%c0_34, %c0_35] : memref<1x32xf32, #tpu.memory_space<vmem>>, vector<1x32xf32>
    %65 = vector.broadcast %64 : vector<1x32xf32> to vector<128x32xf32>
    %66 = arith.mulf %63, %65 : vector<128x32xf32>
    %cst_36 = arith.constant dense<0.000000e+00> : vector<128xf32>
    %67 = vector.multi_reduction <add>, %66, %cst_36 [1] : vector<128x32xf32> to vector<128xf32>
    %68 = vector.shape_cast %67 : vector<128xf32> to vector<128x1xf32>
    %69 = arith.addf %51, %45 : vector<128x1xf32>
    %70 = arith.addf %69, %68 : vector<128x1xf32>
    %71 = arith.negf %70 : vector<128x1xf32>
    %72 = math.exp %71 : vector<128x1xf32>
    %cst_37 = arith.constant 1.000000e+00 : f32
    %73 = vector.broadcast %cst_37 : f32 to vector<128x1xf32>
    %74 = arith.addf %73, %72 : vector<128x1xf32>
    %75 = arith.divf %73, %74 : vector<128x1xf32>
    %c0_38 = arith.constant 0 : index
    %c0_39 = arith.constant 0 : index
    %76 = vector.load %arg9[%c0_38, %c0_39] : memref<128x1xf32, #tpu.memory_space<vmem>>, vector<128x1xf32>
    tpu.vector_store %arg9[%c0_38, %c0_39], %75 {strides = array<i32>} : memref<128x1xf32, #tpu.memory_space<vmem>>, vector<128x1xf32>,
    return
  }
  func.func @transform_0(%arg0: i32) -> (i32, i32) {
    %c0_i32 = arith.constant 0 : i32
    %c0_i32_0 = arith.constant 0 : i32
    return %arg0, %c0_i32 : i32, i32
  }
  func.func @transform_1(%arg0: i32) -> (i32, i32) {
    %c0_i32 = arith.constant 0 : i32
    %c0_i32_0 = arith.constant 0 : i32
    %c0_i32_1 = arith.constant 0 : i32
    return %c0_i32, %c0_i32_0 : i32, i32
  }
  func.func @transform_2(%arg0: i32) -> (i32, i32) {
    %c0_i32 = arith.constant 0 : i32
    %c0_i32_0 = arith.constant 0 : i32
    %c0_i32_1 = arith.constant 0 : i32
    return %c0_i32, %c0_i32_0 : i32, i32
  }
  func.func @transform_3(%arg0: i32) -> (i32, i32) {
    %c0_i32 = arith.constant 0 : i32
    %c0_i32_0 = arith.constant 0 : i32
    %c0_i32_1 = arith.constant 0 : i32
    return %c0_i32, %c0_i32_0 : i32, i32
  }
  func.func @transform_4(%arg0: i32) -> (i32, i32) {
    %c0_i32 = arith.constant 0 : i32
    %c0_i32_0 = arith.constant 0 : i32
    %c0_i32_1 = arith.constant 0 : i32
    return %c0_i32, %c0_i32_0 : i32, i32
  }
  func.func @transform_5(%arg0: i32) -> (i32, i32) {
    %c0_i32 = arith.constant 0 : i32
    %c0_i32_0 = arith.constant 0 : i32
    %c0_i32_1 = arith.constant 0 : i32
    return %c0_i32, %c0_i32_0 : i32, i32
  }
  func.func @transform_6(%arg0: i32) -> (i32, i32) {
    %c0_i32 = arith.constant 0 : i32
    %c0_i32_0 = arith.constant 0 : i32
    %c0_i32_1 = arith.constant 0 : i32
    return %c0_i32, %c0_i32_0 : i32, i32
  }
  func.func @transform_7(%arg0: i32) -> (i32, i32) {
    %c0_i32 = arith.constant 0 : i32
    %c0_i32_0 = arith.constant 0 : i32
    %c0_i32_1 = arith.constant 0 : i32
    return %c0_i32, %c0_i32_0 : i32, i32
  }
  func.func @transform_8(%arg0: i32) -> (i32, i32) {
    %c0_i32 = arith.constant 0 : i32
    %c0_i32_0 = arith.constant 0 : i32
    return %arg0, %c0_i32 : i32, i32
  }
}

</mosaic_0001>

<llo_original>
// kernel: tpu_custom_call.1
$region0: #{tpu_custom_call.1}
  #allocation0 [shape = 'u32[]', space=smem, size = 0x4, offset = 0x4, fixed_abs, tag = 'smem constant byte address 0x4 - core index']
  #allocation1 [shape = 'u32[144,128]{1,0:T(1,128)}', space=vmem, size = 0x12000, scoped, tag = 'internal scratch']
  %s0 = inlined_call_operand.vmem [shape: s32[128,4], index: 0, kind: input, shape index: {}]
  %s1 = inlined_call_operand.vmem [shape: f32[512,32], index: 1, kind: input, shape index: {}]
  %s2 = inlined_call_operand.vmem [shape: f32[128,16], index: 2, kind: input, shape index: {}]
  %s3 = inlined_call_operand.vmem [shape: f32[128,2], index: 3, kind: input, shape index: {}]
  %s4 = inlined_call_operand.vmem [shape: f32[1,32], index: 4, kind: input, shape index: {}]
  %s5 = inlined_call_operand.vmem [shape: f32[32,32], index: 5, kind: input, shape index: {}]
  %s6 = inlined_call_operand.vmem [shape: f32[1,32], index: 6, kind: input, shape index: {}]
  %s7 = inlined_call_operand.vmem [shape: f32[1,32], index: 7, kind: input, shape index: {}]
  %s8 = inlined_call_operand.vmem [shape: f32[128,1], index: 8, kind: output, shape index: {}]
  %s9 = sld [smem:[#allocation0]]
  $region42: #{tpu_custom_call.1} parent=0
    _
  %s11 = ssub.s32 1, %s9
  %s12 = scalar_select 0, %s11, %s9
  // Predicated region
  $region2: #{tpu_custom_call.1} parent=0 // pred_check
    _
  $region3: #{tpu_custom_call.1} parent=0 // pred_check_branch
    %14 = sbr.rel (0) target = $region5
  $region4: #{tpu_custom_call.1} parent=0 // pred_region
    _
  $region5: #{tpu_custom_call.1} parent=0 // pred_fallthru
    _
  // Predicated region
  $region6: #{tpu_custom_call.1} parent=0 // pred_check
    _
  $region7: #{tpu_custom_call.1} parent=0 // pred_check_branch
    %16 = sbr.rel (0) target = $region9
  $region8: #{tpu_custom_call.1} parent=0 // pred_region
    _
  $region9: #{tpu_custom_call.1} parent=0 // pred_fallthru
    _
  // Predicated region
  $region10: #{tpu_custom_call.1} parent=0 // pred_check
    _
  $region11: #{tpu_custom_call.1} parent=0 // pred_check_branch
    %18 = sbr.rel (0) target = $region13
  $region12: #{tpu_custom_call.1} parent=0 // pred_region
    _
  $region13: #{tpu_custom_call.1} parent=0 // pred_fallthru
    _
  // Predicated region
  $region14: #{tpu_custom_call.1} parent=0 // pred_check
    _
  $region15: #{tpu_custom_call.1} parent=0 // pred_check_branch
    %20 = sbr.rel (0) target = $region17
  $region16: #{tpu_custom_call.1} parent=0 // pred_region
    _
  $region17: #{tpu_custom_call.1} parent=0 // pred_fallthru
    _
  // Predicated region
  $region18: #{tpu_custom_call.1} parent=0 // pred_check
    _
  $region19: #{tpu_custom_call.1} parent=0 // pred_check_branch
    %22 = sbr.rel (0) target = $region21
  $region20: #{tpu_custom_call.1} parent=0 // pred_region
    _
  $region21: #{tpu_custom_call.1} parent=0 // pred_fallthru
    _
  // Predicated region
  $region22: #{tpu_custom_call.1} parent=0 // pred_check
    _
  $region23: #{tpu_custom_call.1} parent=0 // pred_check_branch
    %24 = sbr.rel (0) target = $region25
  $region24: #{tpu_custom_call.1} parent=0 // pred_region
    _
  $region25: #{tpu_custom_call.1} parent=0 // pred_fallthru
    _
  // Predicated region
  $region26: #{tpu_custom_call.1} parent=0 // pred_check
    _
  $region27: #{tpu_custom_call.1} parent=0 // pred_check_branch
    %26 = sbr.rel (0) target = $region29
  $region28: #{tpu_custom_call.1} parent=0 // pred_region
    _
  $region29: #{tpu_custom_call.1} parent=0 // pred_fallthru
    _
  // Predicated region
  $region30: #{tpu_custom_call.1} parent=0 // pred_check
    _
  $region31: #{tpu_custom_call.1} parent=0 // pred_check_branch
    %28 = sbr.rel (0) target = $region33
  $region32: #{tpu_custom_call.1} parent=0 // pred_region
    _
  $region33: #{tpu_custom_call.1} parent=0 // pred_fallthru
    _
  %v29 = vld [vmem:[%s0] sm:$0xff]
  %v30 = vld [vmem:[%s0 + $0x8] sm:$0xff]
  %v31 = vld [vmem:[%s0 + $0x10] sm:$0xff]
  %v32 = vld [vmem:[%s0 + $0x18] sm:$0xff]
  %v33 = vld [vmem:[%s0 + $0x20] sm:$0xff]
  %v34 = vld [vmem:[%s0 + $0x28] sm:$0xff]
  %v35 = vld [vmem:[%s0 + $0x30] sm:$0xff]
  %v36 = vld [vmem:[%s0 + $0x38] sm:$0xff]
  %v37 = vld [vmem:[%s0 + $0x40] sm:$0xff]
  %v38 = vld [vmem:[%s0 + $0x48] sm:$0xff]
  %v39 = vld [vmem:[%s0 + $0x50] sm:$0xff]
  %v40 = vld [vmem:[%s0 + $0x58] sm:$0xff]
  %v41 = vld [vmem:[%s0 + $0x60] sm:$0xff]
  %v42 = vld [vmem:[%s0 + $0x68] sm:$0xff]
  %v43 = vld [vmem:[%s0 + $0x70] sm:$0xff]
  %v44 = vld [vmem:[%s0 + $0x78] sm:$0xff]
  %v45 = vlaneseq
  %v46 = vand.u32 %v45, 127
  %47 = vset.pattern.permute.xlu0 0
  %48 = vperm.xlu0 %47, %v29
  %v49 = vpop.permute.xlu0 %48
  %50 = vset.pattern.permute.xlu0 0
  %51 = vperm.xlu0 %50, %v30
  %v52 = vpop.permute.xlu0 %51
  %53 = vset.pattern.permute.xlu0 0
  %54 = vperm.xlu0 %53, %v31
  %v55 = vpop.permute.xlu0 %54
  %56 = vset.pattern.permute.xlu0 0
  %57 = vperm.xlu0 %56, %v32
  %v58 = vpop.permute.xlu0 %57
  %59 = vset.pattern.permute.xlu0 0
  %60 = vperm.xlu0 %59, %v33
  %v61 = vpop.permute.xlu0 %60
  %62 = vset.pattern.permute.xlu0 0
  %63 = vperm.xlu0 %62, %v34
  %v64 = vpop.permute.xlu0 %63
  %65 = vset.pattern.permute.xlu0 0
  %66 = vperm.xlu0 %65, %v35
  %v67 = vpop.permute.xlu0 %66
  %68 = vset.pattern.permute.xlu0 0
  %69 = vperm.xlu0 %68, %v36
  %v70 = vpop.permute.xlu0 %69
  %71 = vset.pattern.permute.xlu0 0
  %72 = vperm.xlu0 %71, %v37
  %v73 = vpop.permute.xlu0 %72
  %74 = vset.pattern.permute.xlu0 0
  %75 = vperm.xlu0 %74, %v38
  %v76 = vpop.permute.xlu0 %75
  %77 = vset.pattern.permute.xlu0 0
  %78 = vperm.xlu0 %77, %v39
  %v79 = vpop.permute.xlu0 %78
  %80 = vset.pattern.permute.xlu0 0
  %81 = vperm.xlu0 %80, %v40
  %v82 = vpop.permute.xlu0 %81
  %83 = vset.pattern.permute.xlu0 0
  %84 = vperm.xlu0 %83, %v41
  %v85 = vpop.permute.xlu0 %84
  %86 = vset.pattern.permute.xlu0 0
  %87 = vperm.xlu0 %86, %v42
  %v88 = vpop.permute.xlu0 %87
  %89 = vset.pattern.permute.xlu0 0
  %90 = vperm.xlu0 %89, %v43
  %v91 = vpop.permute.xlu0 %90
  %92 = vset.pattern.permute.xlu0 0
  %93 = vperm.xlu0 %92, %v44
  %v94 = vpop.permute.xlu0 %93
  %vm95 = vcmp.eq.s32.totalorder %v49, %v46
  %vm96 = vcmp.eq.s32.totalorder %v52, %v46
  %vm97 = vcmp.eq.s32.totalorder %v55, %v46
  %vm98 = vcmp.eq.s32.totalorder %v58, %v46
  %vm99 = vcmp.eq.s32.totalorder %v61, %v46
  %vm100 = vcmp.eq.s32.totalorder %v64, %v46
  %vm101 = vcmp.eq.s32.totalorder %v67, %v46
  %vm102 = vcmp.eq.s32.totalorder %v70, %v46
  %vm103 = vcmp.eq.s32.totalorder %v73, %v46
  %vm104 = vcmp.eq.s32.totalorder %v76, %v46
  %vm105 = vcmp.eq.s32.totalorder %v79, %v46
  %vm106 = vcmp.eq.s32.totalorder %v82, %v46
  %vm107 = vcmp.eq.s32.totalorder %v85, %v46
  %vm108 = vcmp.eq.s32.totalorder %v88, %v46
  %vm109 = vcmp.eq.s32.totalorder %v91, %v46
  %vm110 = vcmp.eq.s32.totalorder %v94, %v46
  %v111 = vsel %vm95, 1.0, 0.0
  %v112 = vsel %vm96, 1.0, 0.0
  %v113 = vsel %vm97, 1.0, 0.0
  %v114 = vsel %vm98, 1.0, 0.0
  %v115 = vsel %vm99, 1.0, 0.0
  %v116 = vsel %vm100, 1.0, 0.0
  %v117 = vsel %vm101, 1.0, 0.0
  %v118 = vsel %vm102, 1.0, 0.0
  %v119 = vsel %vm103, 1.0, 0.0
  %v120 = vsel %vm104, 1.0, 0.0
  %v121 = vsel %vm105, 1.0, 0.0
  %v122 = vsel %vm106, 1.0, 0.0
  %v123 = vsel %vm107, 1.0, 0.0
  %v124 = vsel %vm108, 1.0, 0.0
  %v125 = vsel %vm109, 1.0, 0.0
  %v126 = vsel %vm110, 1.0, 0.0
  %v127 = vld [vmem:[%s1] sm:$0xff]
  %v128 = vld [vmem:[%s1 + $0x8] sm:$0xff]
  %v129 = vld [vmem:[%s1 + $0x10] sm:$0xff]
  %v130 = vld [vmem:[%s1 + $0x18] sm:$0xff]
  %v131 = vld [vmem:[%s1 + $0x20] sm:$0xff]
  %v132 = vld [vmem:[%s1 + $0x28] sm:$0xff]
  %v133 = vld [vmem:[%s1 + $0x30] sm:$0xff]
  %v134 = vld [vmem:[%s1 + $0x38] sm:$0xff]
  %v135 = vld [vmem:[%s1 + $0x40] sm:$0xff]
  %v136 = vld [vmem:[%s1 + $0x48] sm:$0xff]
  %v137 = vld [vmem:[%s1 + $0x50] sm:$0xff]
  %v138 = vld [vmem:[%s1 + $0x58] sm:$0xff]
  %v139 = vld [vmem:[%s1 + $0x60] sm:$0xff]
  %v140 = vld [vmem:[%s1 + $0x68] sm:$0xff]
  %v141 = vld [vmem:[%s1 + $0x70] sm:$0xff]
  %v142 = vld [vmem:[%s1 + $0x78] sm:$0xff]
  %143 = vset.pattern.permute.xlu0 1
  %144 = vperm.xlu0 %143, %v29
  %v145 = vpop.permute.xlu0 %144
  %146 = vset.pattern.permute.xlu0 1
  %147 = vperm.xlu0 %146, %v30
  %v148 = vpop.permute.xlu0 %147
  %149 = vset.pattern.permute.xlu0 1
  %150 = vperm.xlu0 %149, %v31
  %v151 = vpop.permute.xlu0 %150
  %152 = vset.pattern.permute.xlu0 1
  %153 = vperm.xlu0 %152, %v32
  %v154 = vpop.permute.xlu0 %153
  %155 = vset.pattern.permute.xlu0 1
  %156 = vperm.xlu0 %155, %v33
  %v157 = vpop.permute.xlu0 %156
  %158 = vset.pattern.permute.xlu0 1
  %159 = vperm.xlu0 %158, %v34
  %v160 = vpop.permute.xlu0 %159
  %161 = vset.pattern.permute.xlu0 1
  %162 = vperm.xlu0 %161, %v35
  %v163 = vpop.permute.xlu0 %162
  %164 = vset.pattern.permute.xlu0 1
  %165 = vperm.xlu0 %164, %v36
  %v166 = vpop.permute.xlu0 %165
  %167 = vset.pattern.permute.xlu0 1
  %168 = vperm.xlu0 %167, %v37
  %v169 = vpop.permute.xlu0 %168
  %170 = vset.pattern.permute.xlu0 1
  %171 = vperm.xlu0 %170, %v38
  %v172 = vpop.permute.xlu0 %171
  %173 = vset.pattern.permute.xlu0 1
  %174 = vperm.xlu0 %173, %v39
  %v175 = vpop.permute.xlu0 %174
  %176 = vset.pattern.permute.xlu0 1
  %177 = vperm.xlu0 %176, %v40
  %v178 = vpop.permute.xlu0 %177
  %179 = vset.pattern.permute.xlu0 1
  %180 = vperm.xlu0 %179, %v41
  %v181 = vpop.permute.xlu0 %180
  %182 = vset.pattern.permute.xlu0 1
  %183 = vperm.xlu0 %182, %v42
  %v184 = vpop.permute.xlu0 %183
  %185 = vset.pattern.permute.xlu0 1
  %186 = vperm.xlu0 %185, %v43
  %v187 = vpop.permute.xlu0 %186
  %188 = vset.pattern.permute.xlu0 1
  %189 = vperm.xlu0 %188, %v44
  %v190 = vpop.permute.xlu0 %189
  %vm191 = vcmp.eq.s32.totalorder %v145, %v46
  %vm192 = vcmp.eq.s32.totalorder %v148, %v46
  %vm193 = vcmp.eq.s32.totalorder %v151, %v46
  %vm194 = vcmp.eq.s32.totalorder %v154, %v46
  %vm195 = vcmp.eq.s32.totalorder %v157, %v46
  %vm196 = vcmp.eq.s32.totalorder %v160, %v46
  %vm197 = vcmp.eq.s32.totalorder %v163, %v46
  %vm198 = vcmp.eq.s32.totalorder %v166, %v46
  %vm199 = vcmp.eq.s32.totalorder %v169, %v46
  %vm200 = vcmp.eq.s32.totalorder %v172, %v46
  %vm201 = vcmp.eq.s32.totalorder %v175, %v46
  %vm202 = vcmp.eq.s32.totalorder %v178, %v46
  %vm203 = vcmp.eq.s32.totalorder %v181, %v46
  %vm204 = vcmp.eq.s32.totalorder %v184, %v46
  %vm205 = vcmp.eq.s32.totalorder %v187, %v46
  %vm206 = vcmp.eq.s32.totalorder %v190, %v46
  %v207 = vsel %vm191, 1.0, 0.0
  %v208 = vsel %vm192, 1.0, 0.0
  %v209 = vsel %vm193, 1.0, 0.0
  %v210 = vsel %vm194, 1.0, 0.0
  %v211 = vsel %vm195, 1.0, 0.0
  %v212 = vsel %vm196, 1.0, 0.0
  %v213 = vsel %vm197, 1.0, 0.0
  %v214 = vsel %vm198, 1.0, 0.0
  %v215 = vsel %vm199, 1.0, 0.0
  %v216 = vsel %vm200, 1.0, 0.0
  %v217 = vsel %vm201, 1.0, 0.0
  %v218 = vsel %vm202, 1.0, 0.0
  %v219 = vsel %vm203, 1.0, 0.0
  %v220 = vsel %vm204, 1.0, 0.0
  %v221 = vsel %vm205, 1.0, 0.0
  %v222 = vsel %vm206, 1.0, 0.0
  %v223 = vadd.f32 %v111, %v207
  %v224 = vadd.f32 %v112, %v208
  %v225 = vadd.f32 %v113, %v209
  %v226 = vadd.f32 %v114, %v210
  %v227 = vadd.f32 %v115, %v211
  %v228 = vadd.f32 %v116, %v212
  %v229 = vadd.f32 %v117, %v213
  %v230 = vadd.f32 %v118, %v214
  %v231 = vadd.f32 %v119, %v215
  %v232 = vadd.f32 %v120, %v216
  %v233 = vadd.f32 %v121, %v217
  %v234 = vadd.f32 %v122, %v218
  %v235 = vadd.f32 %v123, %v219
  %v236 = vadd.f32 %v124, %v220
  %v237 = vadd.f32 %v125, %v221
  %v238 = vadd.f32 %v126, %v222
  %v239 = vld [vmem:[%s1 + $0x80] sm:$0xff]
  %v240 = vld [vmem:[%s1 + $0x88] sm:$0xff]
  %v241 = vld [vmem:[%s1 + $0x90] sm:$0xff]
  %v242 = vld [vmem:[%s1 + $0x98] sm:$0xff]
  %v243 = vld [vmem:[%s1 + $0xa0] sm:$0xff]
  %v244 = vld [vmem:[%s1 + $0xa8] sm:$0xff]
  %v245 = vld [vmem:[%s1 + $0xb0] sm:$0xff]
  %v246 = vld [vmem:[%s1 + $0xb8] sm:$0xff]
  %v247 = vld [vmem:[%s1 + $0xc0] sm:$0xff]
  %v248 = vld [vmem:[%s1 + $0xc8] sm:$0xff]
  %v249 = vld [vmem:[%s1 + $0xd0] sm:$0xff]
  %v250 = vld [vmem:[%s1 + $0xd8] sm:$0xff]
  %v251 = vld [vmem:[%s1 + $0xe0] sm:$0xff]
  %v252 = vld [vmem:[%s1 + $0xe8] sm:$0xff]
  %v253 = vld [vmem:[%s1 + $0xf0] sm:$0xff]
  %v254 = vld [vmem:[%s1 + $0xf8] sm:$0xff]
  %255 = vmatprep.subr.mxu0 0.0
  %256 = vmatpush1.msra.mxu0 %v254
  %257 = vmatprep.subr.mxu0 0.0
  %258 = vmatpush1.msra.mxu0 %v253
  %259 = vmatprep.subr.mxu0 0.0
  %260 = vmatpush1.msra.mxu0 %v252
  %261 = vmatprep.subr.mxu0 0.0
  %262 = vmatpush1.msra.mxu0 %v251
  %263 = vmatprep.subr.mxu0 0.0
  %264 = vmatpush1.msra.mxu0 %v250
  %265 = vmatprep.subr.mxu0 0.0
  %266 = vmatpush1.msra.mxu0 %v249
  %267 = vmatprep.subr.mxu0 0.0
  %268 = vmatpush1.msra.mxu0 %v248
  %269 = vmatprep.subr.mxu0 0.0
  %270 = vmatpush1.msra.mxu0 %v247
  %271 = vmatprep.subr.mxu0 0.0
  %272 = vmatpush1.msra.mxu0 %v246
  %273 = vmatprep.subr.mxu0 0.0
  %274 = vmatpush1.msra.mxu0 %v245
  %275 = vmatprep.subr.mxu0 0.0
  %276 = vmatpush1.msra.mxu0 %v244
  %277 = vmatprep.subr.mxu0 0.0
  %278 = vmatpush1.msra.mxu0 %v243
  %279 = vmatprep.subr.mxu0 0.0
  %280 = vmatpush1.msra.mxu0 %v242
  %281 = vmatprep.subr.mxu0 0.0
  %282 = vmatpush1.msra.mxu0 %v241
  %283 = vmatprep.subr.mxu0 0.0
  %284 = vmatpush1.msra.mxu0 %v240
  %285 = vmatprep.subr.mxu0 0.0
  %286 = vmatpush1.msra.mxu0 %v239
  %287 = vmatprep.subr.mxu0 0.0
  %288 = vmatpush2.msra.mxu0 0.0
  %289 = vmatprep.subr.mxu0 0.0
  %290 = vmatpush2.msra.mxu0 0.0
  %291 = vmatprep.subr.mxu0 0.0
  %292 = vmatpush2.msra.mxu0 0.0
  %293 = vmatprep.subr.mxu0 0.0
  %294 = vmatpush2.msra.mxu0 0.0
  %295 = vmatprep.subr.mxu0 0.0
  %296 = vmatpush2.msra.mxu0 0.0
  %297 = vmatprep.subr.mxu0 0.0
  %298 = vmatpush2.msra.mxu0 0.0
  %299 = vmatprep.subr.mxu0 0.0
  %300 = vmatpush2.msra.mxu0 0.0
  %301 = vmatprep.subr.mxu0 0.0
  %302 = vmatpush2.msra.mxu0 0.0
  %303 = vmatprep.subr.mxu0 0.0
  %304 = vmatpush2.msra.mxu0 0.0
  %305 = vmatprep.subr.mxu0 0.0
  %306 = vmatpush2.msra.mxu0 0.0
  %307 = vmatprep.subr.mxu0 0.0
  %308 = vmatpush2.msra.mxu0 0.0
  %309 = vmatprep.subr.mxu0 0.0
  %310 = vmatpush2.msra.mxu0 0.0
  %311 = vmatprep.subr.mxu0 0.0
  %312 = vmatpush2.msra.mxu0 0.0
  %313 = vmatprep.subr.mxu0 0.0
  %314 = vmatpush2.msra.mxu0 0.0
  %315 = vmatprep.subr.mxu0 0.0
  %316 = vmatpush2.msra.mxu0 0.0
  %317 = vmatprep.subr.mxu0 0.0
  %318 = vmatpush2.msra.mxu0 0.0
  %319 = vmatprep.mubr.f32.mxu0 0.0
  %320 = vmatmul.mubr.f32.gmra.mxu0 %v207
  %v321 = vpop.f32.mrf.mxu0
  %v322 = vadd.f32 0.0, %v321
  %v323 = vpop.f32.mrf.mxu0
  %324 = vmatprep.mubr.f32.mxu0 0.0
  %325 = vmatmul.mubr.f32.gmra.mxu0 %v208
  %v326 = vpop.f32.mrf.mxu0
  %v327 = vadd.f32 0.0, %v326
  %v328 = vpop.f32.mrf.mxu0
  %329 = vmatprep.mubr.f32.mxu0 0.0
  %330 = vmatmul.mubr.f32.gmra.mxu0 %v209
  %v331 = vpop.f32.mrf.mxu0
  %v332 = vadd.f32 0.0, %v331
  %v333 = vpop.f32.mrf.mxu0
  %334 = vmatprep.mubr.f32.mxu0 0.0
  %335 = vmatmul.mubr.f32.gmra.mxu0 %v210
  %v336 = vpop.f32.mrf.mxu0
  %v337 = vadd.f32 0.0, %v336
  %v338 = vpop.f32.mrf.mxu0
  %339 = vmatprep.mubr.f32.mxu0 0.0
  %340 = vmatmul.mubr.f32.gmra.mxu0 %v211
  %v341 = vpop.f32.mrf.mxu0
  %v342 = vadd.f32 0.0, %v341
  %v343 = vpop.f32.mrf.mxu0
  %344 = vmatprep.mubr.f32.mxu0 0.0
  %345 = vmatmul.mubr.f32.gmra.mxu0 %v212
  %v346 = vpop.f32.mrf.mxu0
  %v347 = vadd.f32 0.0, %v346
  %v348 = vpop.f32.mrf.mxu0
  %349 = vmatprep.mubr.f32.mxu0 0.0
  %350 = vmatmul.mubr.f32.gmra.mxu0 %v213
  %v351 = vpop.f32.mrf.mxu0
  %v352 = vadd.f32 0.0, %v351
  %v353 = vpop.f32.mrf.mxu0
  %354 = vmatprep.mubr.f32.mxu0 0.0
  %355 = vmatmul.mubr.f32.gmra.mxu0 %v214
  %v356 = vpop.f32.mrf.mxu0
  %v357 = vadd.f32 0.0, %v356
  %v358 = vpop.f32.mrf.mxu0
  %359 = vmatprep.mubr.f32.mxu0 0.0
  %360 = vmatmul.mubr.f32.gmra.mxu0 %v215
  %v361 = vpop.f32.mrf.mxu0
  %v362 = vadd.f32 0.0, %v361
  %v363 = vpop.f32.mrf.mxu0
  %364 = vmatprep.mubr.f32.mxu0 0.0
  %365 = vmatmul.mubr.f32.gmra.mxu0 %v216
  %v366 = vpop.f32.mrf.mxu0
  %v367 = vadd.f32 0.0, %v366
  %v368 = vpop.f32.mrf.mxu0
  %369 = vmatprep.mubr.f32.mxu0 0.0
  %370 = vmatmul.mubr.f32.gmra.mxu0 %v217
  %v371 = vpop.f32.mrf.mxu0
  %v372 = vadd.f32 0.0, %v371
  %v373 = vpop.f32.mrf.mxu0
  %374 = vmatprep.mubr.f32.mxu0 0.0
  %375 = vmatmul.mubr.f32.gmra.mxu0 %v218
  %v376 = vpop.f32.mrf.mxu0
  %v377 = vadd.f32 0.0, %v376
  %v378 = vpop.f32.mrf.mxu0
  %379 = vmatprep.mubr.f32.mxu0 0.0
  %380 = vmatmul.mubr.f32.gmra.mxu0 %v219
  %v381 = vpop.f32.mrf.mxu0
  %v382 = vadd.f32 0.0, %v381
  %v383 = vpop.f32.mrf.mxu0
  %384 = vmatprep.mubr.f32.mxu0 0.0
  %385 = vmatmul.mubr.f32.gmra.mxu0 %v220
  %v386 = vpop.f32.mrf.mxu0
  %v387 = vadd.f32 0.0, %v386
  %v388 = vpop.f32.mrf.mxu0
  %389 = vmatprep.mubr.f32.mxu0 0.0
  %390 = vmatmul.mubr.f32.gmra.mxu0 %v221
  %v391 = vpop.f32.mrf.mxu0
  %v392 = vadd.f32 0.0, %v391
  %v393 = vpop.f32.mrf.mxu0
  %394 = vmatprep.mubr.f32.mxu0 0.0
  %395 = vmatmul.mubr.f32.gmra.mxu0 %v222
  %v396 = vpop.f32.mrf.mxu0
  %v397 = vadd.f32 0.0, %v396
  %v398 = vpop.f32.mrf.mxu0
  %399 = vdwg.mxu0
  %400 = vmatprep.subr.mxu0 0.0
  %401 = vmatpush1.msra.mxu0 %v142
  %402 = vmatprep.subr.mxu0 0.0
  %403 = vmatpush1.msra.mxu0 %v141
  %404 = vmatprep.subr.mxu0 0.0
  %405 = vmatpush1.msra.mxu0 %v140
  %406 = vmatprep.subr.mxu0 0.0
  %407 = vmatpush1.msra.mxu0 %v139
  %408 = vmatprep.subr.mxu0 0.0
  %409 = vmatpush1.msra.mxu0 %v138
  %410 = vmatprep.subr.mxu0 0.0
  %411 = vmatpush1.msra.mxu0 %v137
  %412 = vmatprep.subr.mxu0 0.0
  %413 = vmatpush1.msra.mxu0 %v136
  %414 = vmatprep.subr.mxu0 0.0
  %415 = vmatpush1.msra.mxu0 %v135
  %416 = vmatprep.subr.mxu0 0.0
  %417 = vmatpush1.msra.mxu0 %v134
  %418 = vmatprep.subr.mxu0 0.0
  %419 = vmatpush1.msra.mxu0 %v133
  %420 = vmatprep.subr.mxu0 0.0
  %421 = vmatpush1.msra.mxu0 %v132
  %422 = vmatprep.subr.mxu0 0.0
  %423 = vmatpush1.msra.mxu0 %v131
  %424 = vmatprep.subr.mxu0 0.0
  %425 = vmatpush1.msra.mxu0 %v130
  %426 = vmatprep.subr.mxu0 0.0
  %427 = vmatpush1.msra.mxu0 %v129
  %428 = vmatprep.subr.mxu0 0.0
  %429 = vmatpush1.msra.mxu0 %v128
  %430 = vmatprep.subr.mxu0 0.0
  %431 = vmatpush1.msra.mxu0 %v127
  %432 = vmatprep.subr.mxu0 0.0
  %433 = vmatpush2.msra.mxu0 0.0
  %434 = vmatprep.subr.mxu0 0.0
  %435 = vmatpush2.msra.mxu0 0.0
  %436 = vmatprep.subr.mxu0 0.0
  %437 = vmatpush2.msra.mxu0 0.0
  %438 = vmatprep.subr.mxu0 0.0
  %439 = vmatpush2.msra.mxu0 0.0
  %440 = vmatprep.subr.mxu0 0.0
  %441 = vmatpush2.msra.mxu0 0.0
  %442 = vmatprep.subr.mxu0 0.0
  %443 = vmatpush2.msra.mxu0 0.0
  %444 = vmatprep.subr.mxu0 0.0
  %445 = vmatpush2.msra.mxu0 0.0
  %446 = vmatprep.subr.mxu0 0.0
  %447 = vmatpush2.msra.mxu0 0.0
  %448 = vmatprep.subr.mxu0 0.0
  %449 = vmatpush2.msra.mxu0 0.0
  %450 = vmatprep.subr.mxu0 0.0
  %451 = vmatpush2.msra.mxu0 0.0
  %452 = vmatprep.subr.mxu0 0.0
  %453 = vmatpush2.msra.mxu0 0.0
  %454 = vmatprep.subr.mxu0 0.0
  %455 = vmatpush2.msra.mxu0 0.0
  %456 = vmatprep.subr.mxu0 0.0
  %457 = vmatpush2.msra.mxu0 0.0
  %458 = vmatprep.subr.mxu0 0.0
  %459 = vmatpush2.msra.mxu0 0.0
  %460 = vmatprep.subr.mxu0 0.0
  %461 = vmatpush2.msra.mxu0 0.0
  %462 = vmatprep.subr.mxu0 0.0
  %463 = vmatpush2.msra.mxu0 0.0
  %464 = vmatprep.mubr.f32.mxu0 0.0
  %465 = vmatmul.mubr.f32.gmra.mxu0 %v111
  %v466 = vpop.f32.mrf.mxu0
  %v467 = vadd.f32 %v322, %v466
  %v468 = vpop.f32.mrf.mxu0
  %469 = vmatprep.mubr.f32.mxu0 0.0
  %470 = vmatmul.mubr.f32.gmra.mxu0 %v112
  %v471 = vpop.f32.mrf.mxu0
  %v472 = vadd.f32 %v327, %v471
  %v473 = vpop.f32.mrf.mxu0
  %474 = vmatprep.mubr.f32.mxu0 0.0
  %475 = vmatmul.mubr.f32.gmra.mxu0 %v113
  %v476 = vpop.f32.mrf.mxu0
  %v477 = vadd.f32 %v332, %v476
  %v478 = vpop.f32.mrf.mxu0
  %479 = vmatprep.mubr.f32.mxu0 0.0
  %480 = vmatmul.mubr.f32.gmra.mxu0 %v114
  %v481 = vpop.f32.mrf.mxu0
  %v482 = vadd.f32 %v337, %v481
  %v483 = vpop.f32.mrf.mxu0
  %484 = vmatprep.mubr.f32.mxu0 0.0
  %485 = vmatmul.mubr.f32.gmra.mxu0 %v115
  %v486 = vpop.f32.mrf.mxu0
  %v487 = vadd.f32 %v342, %v486
  %v488 = vpop.f32.mrf.mxu0
  %489 = vmatprep.mubr.f32.mxu0 0.0
  %490 = vmatmul.mubr.f32.gmra.mxu0 %v116
  %v491 = vpop.f32.mrf.mxu0
  %v492 = vadd.f32 %v347, %v491
  %v493 = vpop.f32.mrf.mxu0
  %494 = vmatprep.mubr.f32.mxu0 0.0
  %495 = vmatmul.mubr.f32.gmra.mxu0 %v117
  %v496 = vpop.f32.mrf.mxu0
  %v497 = vadd.f32 %v352, %v496
  %v498 = vpop.f32.mrf.mxu0
  %499 = vmatprep.mubr.f32.mxu0 0.0
  %500 = vmatmul.mubr.f32.gmra.mxu0 %v118
  %v501 = vpop.f32.mrf.mxu0
  %v502 = vadd.f32 %v357, %v501
  %v503 = vpop.f32.mrf.mxu0
  %504 = vmatprep.mubr.f32.mxu0 0.0
  %505 = vmatmul.mubr.f32.gmra.mxu0 %v119
  %v506 = vpop.f32.mrf.mxu0
  %v507 = vadd.f32 %v362, %v506
  %v508 = vpop.f32.mrf.mxu0
  %509 = vmatprep.mubr.f32.mxu0 0.0
  %510 = vmatmul.mubr.f32.gmra.mxu0 %v120
  %v511 = vpop.f32.mrf.mxu0
  %v512 = vadd.f32 %v367, %v511
  %v513 = vpop.f32.mrf.mxu0
  %514 = vmatprep.mubr.f32.mxu0 0.0
  %515 = vmatmul.mubr.f32.gmra.mxu0 %v121
  %v516 = vpop.f32.mrf.mxu0
  %v517 = vadd.f32 %v372, %v516
  %v518 = vpop.f32.mrf.mxu0
  %519 = vmatprep.mubr.f32.mxu0 0.0
  %520 = vmatmul.mubr.f32.gmra.mxu0 %v122
  %v521 = vpop.f32.mrf.mxu0
  %v522 = vadd.f32 %v377, %v521
  %v523 = vpop.f32.mrf.mxu0
  %524 = vmatprep.mubr.f32.mxu0 0.0
  %525 = vmatmul.mubr.f32.gmra.mxu0 %v123
  %v526 = vpop.f32.mrf.mxu0
  %v527 = vadd.f32 %v382, %v526
  %v528 = vpop.f32.mrf.mxu0
  %529 = vmatprep.mubr.f32.mxu0 0.0
  %530 = vmatmul.mubr.f32.gmra.mxu0 %v124
  %v531 = vpop.f32.mrf.mxu0
  %v532 = vadd.f32 %v387, %v531
  %v533 = vpop.f32.mrf.mxu0
  %534 = vmatprep.mubr.f32.mxu0 0.0
  %535 = vmatmul.mubr.f32.gmra.mxu0 %v125
  %v536 = vpop.f32.mrf.mxu0
  %v537 = vadd.f32 %v392, %v536
  %v538 = vpop.f32.mrf.mxu0
  %539 = vmatprep.mubr.f32.mxu0 0.0
  %540 = vmatmul.mubr.f32.gmra.mxu0 %v126
  %v541 = vpop.f32.mrf.mxu0
  %v542 = vadd.f32 %v397, %v541
  %v543 = vpop.f32.mrf.mxu0
  %544 = vdwg.mxu0
  %545 = vset.pattern.permute.xlu0 2
  %546 = vperm.xlu0 %545, %v29
  %v547 = vpop.permute.xlu0 %546
  %548 = vset.pattern.permute.xlu0 2
  %549 = vperm.xlu0 %548, %v30
  %v550 = vpop.permute.xlu0 %549
  %551 = vset.pattern.permute.xlu0 2
  %552 = vperm.xlu0 %551, %v31
  %v553 = vpop.permute.xlu0 %552
  %554 = vset.pattern.permute.xlu0 2
  %555 = vperm.xlu0 %554, %v32
  %v556 = vpop.permute.xlu0 %555
  %557 = vset.pattern.permute.xlu0 2
  %558 = vperm.xlu0 %557, %v33
  %v559 = vpop.permute.xlu0 %558
  %560 = vset.pattern.permute.xlu0 2
  %561 = vperm.xlu0 %560, %v34
  %v562 = vpop.permute.xlu0 %561
  %563 = vset.pattern.permute.xlu0 2
  %564 = vperm.xlu0 %563, %v35
  %v565 = vpop.permute.xlu0 %564
  %566 = vset.pattern.permute.xlu0 2
  %567 = vperm.xlu0 %566, %v36
  %v568 = vpop.permute.xlu0 %567
  %569 = vset.pattern.permute.xlu0 2
  %570 = vperm.xlu0 %569, %v37
  %v571 = vpop.permute.xlu0 %570
  %572 = vset.pattern.permute.xlu0 2
  %573 = vperm.xlu0 %572, %v38
  %v574 = vpop.permute.xlu0 %573
  %575 = vset.pattern.permute.xlu0 2
  %576 = vperm.xlu0 %575, %v39
  %v577 = vpop.permute.xlu0 %576
  %578 = vset.pattern.permute.xlu0 2
  %579 = vperm.xlu0 %578, %v40
  %v580 = vpop.permute.xlu0 %579
  %581 = vset.pattern.permute.xlu0 2
  %582 = vperm.xlu0 %581, %v41
  %v583 = vpop.permute.xlu0 %582
  %584 = vset.pattern.permute.xlu0 2
  %585 = vperm.xlu0 %584, %v42
  %v586 = vpop.permute.xlu0 %585
  %587 = vset.pattern.permute.xlu0 2
  %588 = vperm.xlu0 %587, %v43
  %v589 = vpop.permute.xlu0 %588
  %590 = vset.pattern.permute.xlu0 2
  %591 = vperm.xlu0 %590, %v44
  %v592 = vpop.permute.xlu0 %591
  %vm593 = vcmp.eq.s32.totalorder %v547, %v46
  %vm594 = vcmp.eq.s32.totalorder %v550, %v46
  %vm595 = vcmp.eq.s32.totalorder %v553, %v46
  %vm596 = vcmp.eq.s32.totalorder %v556, %v46
  %vm597 = vcmp.eq.s32.totalorder %v559, %v46
  %vm598 = vcmp.eq.s32.totalorder %v562, %v46
  %vm599 = vcmp.eq.s32.totalorder %v565, %v46
  %vm600 = vcmp.eq.s32.totalorder %v568, %v46
  %vm601 = vcmp.eq.s32.totalorder %v571, %v46
  %vm602 = vcmp.eq.s32.totalorder %v574, %v46
  %vm603 = vcmp.eq.s32.totalorder %v577, %v46
  %vm604 = vcmp.eq.s32.totalorder %v580, %v46
  %vm605 = vcmp.eq.s32.totalorder %v583, %v46
  %vm606 = vcmp.eq.s32.totalorder %v586, %v46
  %vm607 = vcmp.eq.s32.totalorder %v589, %v46
  %vm608 = vcmp.eq.s32.totalorder %v592, %v46
  %v609 = vsel %vm593, 1.0, 0.0
  %v610 = vsel %vm594, 1.0, 0.0
  %v611 = vsel %vm595, 1.0, 0.0
  %v612 = vsel %vm596, 1.0, 0.0
  %v613 = vsel %vm597, 1.0, 0.0
  %v614 = vsel %vm598, 1.0, 0.0
  %v615 = vsel %vm599, 1.0, 0.0
  %v616 = vsel %vm600, 1.0, 0.0
  %v617 = vsel %vm601, 1.0, 0.0
  %v618 = vsel %vm602, 1.0, 0.0
  %v619 = vsel %vm603, 1.0, 0.0
  %v620 = vsel %vm604, 1.0, 0.0
  %v621 = vsel %vm605, 1.0, 0.0
  %v622 = vsel %vm606, 1.0, 0.0
  %v623 = vsel %vm607, 1.0, 0.0
  %v624 = vsel %vm608, 1.0, 0.0
  %v625 = vadd.f32 %v223, %v609
  %v626 = vadd.f32 %v224, %v610
  %v627 = vadd.f32 %v225, %v611
  %v628 = vadd.f32 %v226, %v612
  %v629 = vadd.f32 %v227, %v613
  %v630 = vadd.f32 %v228, %v614
  %v631 = vadd.f32 %v229, %v615
  %v632 = vadd.f32 %v230, %v616
  %v633 = vadd.f32 %v231, %v617
  %v634 = vadd.f32 %v232, %v618
  %v635 = vadd.f32 %v233, %v619
  %v636 = vadd.f32 %v234, %v620
  %v637 = vadd.f32 %v235, %v621
  %v638 = vadd.f32 %v236, %v622
  %v639 = vadd.f32 %v237, %v623
  %v640 = vadd.f32 %v238, %v624
  %v641 = vld [vmem:[%s1 + $0x100] sm:$0xff]
  %v642 = vld [vmem:[%s1 + $0x108] sm:$0xff]
  %v643 = vld [vmem:[%s1 + $0x110] sm:$0xff]
  %v644 = vld [vmem:[%s1 + $0x118] sm:$0xff]
  %v645 = vld [vmem:[%s1 + $0x120] sm:$0xff]
  %v646 = vld [vmem:[%s1 + $0x128] sm:$0xff]
  %v647 = vld [vmem:[%s1 + $0x130] sm:$0xff]
  %v648 = vld [vmem:[%s1 + $0x138] sm:$0xff]
  %v649 = vld [vmem:[%s1 + $0x140] sm:$0xff]
  %v650 = vld [vmem:[%s1 + $0x148] sm:$0xff]
  %v651 = vld [vmem:[%s1 + $0x150] sm:$0xff]
  %v652 = vld [vmem:[%s1 + $0x158] sm:$0xff]
  %v653 = vld [vmem:[%s1 + $0x160] sm:$0xff]
  %v654 = vld [vmem:[%s1 + $0x168] sm:$0xff]
  %v655 = vld [vmem:[%s1 + $0x170] sm:$0xff]
  %v656 = vld [vmem:[%s1 + $0x178] sm:$0xff]
  %657 = vmatprep.subr.mxu0 0.0
  %658 = vmatpush1.msra.mxu0 %v656
  %659 = vmatprep.subr.mxu0 0.0
  %660 = vmatpush1.msra.mxu0 %v655
  %661 = vmatprep.subr.mxu0 0.0
  %662 = vmatpush1.msra.mxu0 %v654
  %663 = vmatprep.subr.mxu0 0.0
  %664 = vmatpush1.msra.mxu0 %v653
  %665 = vmatprep.subr.mxu0 0.0
  %666 = vmatpush1.msra.mxu0 %v652
  %667 = vmatprep.subr.mxu0 0.0
  %668 = vmatpush1.msra.mxu0 %v651
  %669 = vmatprep.subr.mxu0 0.0
  %670 = vmatpush1.msra.mxu0 %v650
  %671 = vmatprep.subr.mxu0 0.0
  %672 = vmatpush1.msra.mxu0 %v649
  %673 = vmatprep.subr.mxu0 0.0
  %674 = vmatpush1.msra.mxu0 %v648
  %675 = vmatprep.subr.mxu0 0.0
  %676 = vmatpush1.msra.mxu0 %v647
  %677 = vmatprep.subr.mxu0 0.0
  %678 = vmatpush1.msra.mxu0 %v646
  %679 = vmatprep.subr.mxu0 0.0
  %680 = vmatpush1.msra.mxu0 %v645
  %681 = vmatprep.subr.mxu0 0.0
  %682 = vmatpush1.msra.mxu0 %v644
  %683 = vmatprep.subr.mxu0 0.0
  %684 = vmatpush1.msra.mxu0 %v643
  %685 = vmatprep.subr.mxu0 0.0
  %686 = vmatpush1.msra.mxu0 %v642
  %687 = vmatprep.subr.mxu0 0.0
  %688 = vmatpush1.msra.mxu0 %v641
  %689 = vmatprep.subr.mxu0 0.0
  %690 = vmatpush2.msra.mxu0 0.0
  %691 = vmatprep.subr.mxu0 0.0
  %692 = vmatpush2.msra.mxu0 0.0
  %693 = vmatprep.subr.mxu0 0.0
  %694 = vmatpush2.msra.mxu0 0.0
  %695 = vmatprep.subr.mxu0 0.0
  %696 = vmatpush2.msra.mxu0 0.0
  %697 = vmatprep.subr.mxu0 0.0
  %698 = vmatpush2.msra.mxu0 0.0
  %699 = vmatprep.subr.mxu0 0.0
  %700 = vmatpush2.msra.mxu0 0.0
  %701 = vmatprep.subr.mxu0 0.0
  %702 = vmatpush2.msra.mxu0 0.0
  %703 = vmatprep.subr.mxu0 0.0
  %704 = vmatpush2.msra.mxu0 0.0
  %705 = vmatprep.subr.mxu0 0.0
  %706 = vmatpush2.msra.mxu0 0.0
  %707 = vmatprep.subr.mxu0 0.0
  %708 = vmatpush2.msra.mxu0 0.0
  %709 = vmatprep.subr.mxu0 0.0
  %710 = vmatpush2.msra.mxu0 0.0
  %711 = vmatprep.subr.mxu0 0.0
  %712 = vmatpush2.msra.mxu0 0.0
  %713 = vmatprep.subr.mxu0 0.0
  %714 = vmatpush2.msra.mxu0 0.0
  %715 = vmatprep.subr.mxu0 0.0
  %716 = vmatpush2.msra.mxu0 0.0
  %717 = vmatprep.subr.mxu0 0.0
  %718 = vmatpush2.msra.mxu0 0.0
  %719 = vmatprep.subr.mxu0 0.0
  %720 = vmatpush2.msra.mxu0 0.0
  %721 = vmatprep.mubr.f32.mxu0 0.0
  %722 = vmatmul.mubr.f32.gmra.mxu0 %v609
  %v723 = vpop.f32.mrf.mxu0
  %v724 = vadd.f32 0.0, %v723
  %v725 = vpop.f32.mrf.mxu0
  %726 = vmatprep.mubr.f32.mxu0 0.0
  %727 = vmatmul.mubr.f32.gmra.mxu0 %v610
  %v728 = vpop.f32.mrf.mxu0
  %v729 = vadd.f32 0.0, %v728
  %v730 = vpop.f32.mrf.mxu0
  %731 = vmatprep.mubr.f32.mxu0 0.0
  %732 = vmatmul.mubr.f32.gmra.mxu0 %v611
  %v733 = vpop.f32.mrf.mxu0
  %v734 = vadd.f32 0.0, %v733
  %v735 = vpop.f32.mrf.mxu0
  %736 = vmatprep.mubr.f32.mxu0 0.0
  %737 = vmatmul.mubr.f32.gmra.mxu0 %v612
  %v738 = vpop.f32.mrf.mxu0
  %v739 = vadd.f32 0.0, %v738
  %v740 = vpop.f32.mrf.mxu0
  %741 = vmatprep.mubr.f32.mxu0 0.0
  %742 = vmatmul.mubr.f32.gmra.mxu0 %v613
  %v743 = vpop.f32.mrf.mxu0
  %v744 = vadd.f32 0.0, %v743
  %v745 = vpop.f32.mrf.mxu0
  %746 = vmatprep.mubr.f32.mxu0 0.0
  %747 = vmatmul.mubr.f32.gmra.mxu0 %v614
  %v748 = vpop.f32.mrf.mxu0
  %v749 = vadd.f32 0.0, %v748
  %v750 = vpop.f32.mrf.mxu0
  %751 = vmatprep.mubr.f32.mxu0 0.0
  %752 = vmatmul.mubr.f32.gmra.mxu0 %v615
  %v753 = vpop.f32.mrf.mxu0
  %v754 = vadd.f32 0.0, %v753
  %v755 = vpop.f32.mrf.mxu0
  %756 = vmatprep.mubr.f32.mxu0 0.0
  %757 = vmatmul.mubr.f32.gmra.mxu0 %v616
  %v758 = vpop.f32.mrf.mxu0
  %v759 = vadd.f32 0.0, %v758
  %v760 = vpop.f32.mrf.mxu0
  %761 = vmatprep.mubr.f32.mxu0 0.0
  %762 = vmatmul.mubr.f32.gmra.mxu0 %v617
  %v763 = vpop.f32.mrf.mxu0
  %v764 = vadd.f32 0.0, %v763
  %v765 = vpop.f32.mrf.mxu0
  %766 = vmatprep.mubr.f32.mxu0 0.0
  %767 = vmatmul.mubr.f32.gmra.mxu0 %v618
  %v768 = vpop.f32.mrf.mxu0
  %v769 = vadd.f32 0.0, %v768
  %v770 = vpop.f32.mrf.mxu0
  %771 = vmatprep.mubr.f32.mxu0 0.0
  %772 = vmatmul.mubr.f32.gmra.mxu0 %v619
  %v773 = vpop.f32.mrf.mxu0
  %v774 = vadd.f32 0.0, %v773
  %v775 = vpop.f32.mrf.mxu0
  %776 = vmatprep.mubr.f32.mxu0 0.0
  %777 = vmatmul.mubr.f32.gmra.mxu0 %v620
  %v778 = vpop.f32.mrf.mxu0
  %v779 = vadd.f32 0.0, %v778
  %v780 = vpop.f32.mrf.mxu0
  %781 = vmatprep.mubr.f32.mxu0 0.0
  %782 = vmatmul.mubr.f32.gmra.mxu0 %v621
  %v783 = vpop.f32.mrf.mxu0
  %v784 = vadd.f32 0.0, %v783
  %v785 = vpop.f32.mrf.mxu0
  %786 = vmatprep.mubr.f32.mxu0 0.0
  %787 = vmatmul.mubr.f32.gmra.mxu0 %v622
  %v788 = vpop.f32.mrf.mxu0
  %v789 = vadd.f32 0.0, %v788
  %v790 = vpop.f32.mrf.mxu0
  %791 = vmatprep.mubr.f32.mxu0 0.0
  %792 = vmatmul.mubr.f32.gmra.mxu0 %v623
  %v793 = vpop.f32.mrf.mxu0
  %v794 = vadd.f32 0.0, %v793
  %v795 = vpop.f32.mrf.mxu0
  %796 = vmatprep.mubr.f32.mxu0 0.0
  %797 = vmatmul.mubr.f32.gmra.mxu0 %v624
  %v798 = vpop.f32.mrf.mxu0
  %v799 = vadd.f32 0.0, %v798
  %v800 = vpop.f32.mrf.mxu0
  %801 = vdwg.mxu0
  %v802 = vadd.f32 %v467, %v724
  %v803 = vadd.f32 %v472, %v729
  %v804 = vadd.f32 %v477, %v734
  %v805 = vadd.f32 %v482, %v739
  %v806 = vadd.f32 %v487, %v744
  %v807 = vadd.f32 %v492, %v749
  %v808 = vadd.f32 %v497, %v754
  %v809 = vadd.f32 %v502, %v759
  %v810 = vadd.f32 %v507, %v764
  %v811 = vadd.f32 %v512, %v769
  %v812 = vadd.f32 %v517, %v774
  %v813 = vadd.f32 %v522, %v779
  %v814 = vadd.f32 %v527, %v784
  %v815 = vadd.f32 %v532, %v789
  %v816 = vadd.f32 %v537, %v794
  %v817 = vadd.f32 %v542, %v799
  %818 = vset.pattern.permute.xlu0 3
  %819 = vperm.xlu0 %818, %v29
  %v820 = vpop.permute.xlu0 %819
  %821 = vset.pattern.permute.xlu0 3
  %822 = vperm.xlu0 %821, %v30
  %v823 = vpop.permute.xlu0 %822
  %824 = vset.pattern.permute.xlu0 3
  %825 = vperm.xlu0 %824, %v31
  %v826 = vpop.permute.xlu0 %825
  %827 = vset.pattern.permute.xlu0 3
  %828 = vperm.xlu0 %827, %v32
  %v829 = vpop.permute.xlu0 %828
  %830 = vset.pattern.permute.xlu0 3
  %831 = vperm.xlu0 %830, %v33
  %v832 = vpop.permute.xlu0 %831
  %833 = vset.pattern.permute.xlu0 3
  %834 = vperm.xlu0 %833, %v34
  %v835 = vpop.permute.xlu0 %834
  %836 = vset.pattern.permute.xlu0 3
  %837 = vperm.xlu0 %836, %v35
  %v838 = vpop.permute.xlu0 %837
  %839 = vset.pattern.permute.xlu0 3
  %840 = vperm.xlu0 %839, %v36
  %v841 = vpop.permute.xlu0 %840
  %842 = vset.pattern.permute.xlu0 3
  %843 = vperm.xlu0 %842, %v37
  %v844 = vpop.permute.xlu0 %843
  %845 = vset.pattern.permute.xlu0 3
  %846 = vperm.xlu0 %845, %v38
  %v847 = vpop.permute.xlu0 %846
  %848 = vset.pattern.permute.xlu0 3
  %849 = vperm.xlu0 %848, %v39
  %v850 = vpop.permute.xlu0 %849
  %851 = vset.pattern.permute.xlu0 3
  %852 = vperm.xlu0 %851, %v40
  %v853 = vpop.permute.xlu0 %852
  %854 = vset.pattern.permute.xlu0 3
  %855 = vperm.xlu0 %854, %v41
  %v856 = vpop.permute.xlu0 %855
  %857 = vset.pattern.permute.xlu0 3
  %858 = vperm.xlu0 %857, %v42
  %v859 = vpop.permute.xlu0 %858
  %860 = vset.pattern.permute.xlu0 3
  %861 = vperm.xlu0 %860, %v43
  %v862 = vpop.permute.xlu0 %861
  %863 = vset.pattern.permute.xlu0 3
  %864 = vperm.xlu0 %863, %v44
  %v865 = vpop.permute.xlu0 %864
  %vm866 = vcmp.eq.s32.totalorder %v820, %v46
  %vm867 = vcmp.eq.s32.totalorder %v823, %v46
  %vm868 = vcmp.eq.s32.totalorder %v826, %v46
  %vm869 = vcmp.eq.s32.totalorder %v829, %v46
  %vm870 = vcmp.eq.s32.totalorder %v832, %v46
  %vm871 = vcmp.eq.s32.totalorder %v835, %v46
  %vm872 = vcmp.eq.s32.totalorder %v838, %v46
  %vm873 = vcmp.eq.s32.totalorder %v841, %v46
  %vm874 = vcmp.eq.s32.totalorder %v844, %v46
  %vm875 = vcmp.eq.s32.totalorder %v847, %v46
  %vm876 = vcmp.eq.s32.totalorder %v850, %v46
  %vm877 = vcmp.eq.s32.totalorder %v853, %v46
  %vm878 = vcmp.eq.s32.totalorder %v856, %v46
  %vm879 = vcmp.eq.s32.totalorder %v859, %v46
  %vm880 = vcmp.eq.s32.totalorder %v862, %v46
  %vm881 = vcmp.eq.s32.totalorder %v865, %v46
  %v882 = vsel %vm866, 1.0, 0.0
  %v883 = vsel %vm867, 1.0, 0.0
  %v884 = vsel %vm868, 1.0, 0.0
  %v885 = vsel %vm869, 1.0, 0.0
  %v886 = vsel %vm870, 1.0, 0.0
  %v887 = vsel %vm871, 1.0, 0.0
  %v888 = vsel %vm872, 1.0, 0.0
  %v889 = vsel %vm873, 1.0, 0.0
  %v890 = vsel %vm874, 1.0, 0.0
  %v891 = vsel %vm875, 1.0, 0.0
  %v892 = vsel %vm876, 1.0, 0.0
  %v893 = vsel %vm877, 1.0, 0.0
  %v894 = vsel %vm878, 1.0, 0.0
  %v895 = vsel %vm879, 1.0, 0.0
  %v896 = vsel %vm880, 1.0, 0.0
  %v897 = vsel %vm881, 1.0, 0.0
  %v898 = vadd.f32 %v625, %v882
  %v899 = vadd.f32 %v626, %v883
  %v900 = vadd.f32 %v627, %v884
  %v901 = vadd.f32 %v628, %v885
  %v902 = vadd.f32 %v629, %v886
  %v903 = vadd.f32 %v630, %v887
  %v904 = vadd.f32 %v631, %v888
  %v905 = vadd.f32 %v632, %v889
  %v906 = vadd.f32 %v633, %v890
  %v907 = vadd.f32 %v634, %v891
  %v908 = vadd.f32 %v635, %v892
  %v909 = vadd.f32 %v636, %v893
  %v910 = vadd.f32 %v637, %v894
  %v911 = vadd.f32 %v638, %v895
  %v912 = vadd.f32 %v639, %v896
  %v913 = vadd.f32 %v640, %v897
  %v914 = vld [vmem:[%s1 + $0x180] sm:$0xff]
  %v915 = vld [vmem:[%s1 + $0x188] sm:$0xff]
  %v916 = vld [vmem:[%s1 + $0x190] sm:$0xff]
  %v917 = vld [vmem:[%s1 + $0x198] sm:$0xff]
  %v918 = vld [vmem:[%s1 + $0x1a0] sm:$0xff]
  %v919 = vld [vmem:[%s1 + $0x1a8] sm:$0xff]
  %v920 = vld [vmem:[%s1 + $0x1b0] sm:$0xff]
  %v921 = vld [vmem:[%s1 + $0x1b8] sm:$0xff]
  %v922 = vld [vmem:[%s1 + $0x1c0] sm:$0xff]
  %v923 = vld [vmem:[%s1 + $0x1c8] sm:$0xff]
  %v924 = vld [vmem:[%s1 + $0x1d0] sm:$0xff]
  %v925 = vld [vmem:[%s1 + $0x1d8] sm:$0xff]
  %v926 = vld [vmem:[%s1 + $0x1e0] sm:$0xff]
  %v927 = vld [vmem:[%s1 + $0x1e8] sm:$0xff]
  %v928 = vld [vmem:[%s1 + $0x1f0] sm:$0xff]
  %v929 = vld [vmem:[%s1 + $0x1f8] sm:$0xff]
  %930 = vmatprep.subr.mxu0 0.0
  %931 = vmatpush1.msra.mxu0 %v929
  %932 = vmatprep.subr.mxu0 0.0
  %933 = vmatpush1.msra.mxu0 %v928
  %934 = vmatprep.subr.mxu0 0.0
  %935 = vmatpush1.msra.mxu0 %v927
  %936 = vmatprep.subr.mxu0 0.0
  %937 = vmatpush1.msra.mxu0 %v926
  %938 = vmatprep.subr.mxu0 0.0
  %939 = vmatpush1.msra.mxu0 %v925
  %940 = vmatprep.subr.mxu0 0.0
  %941 = vmatpush1.msra.mxu0 %v924
  %942 = vmatprep.subr.mxu0 0.0
  %943 = vmatpush1.msra.mxu0 %v923
  %944 = vmatprep.subr.mxu0 0.0
  %945 = vmatpush1.msra.mxu0 %v922
  %946 = vmatprep.subr.mxu0 0.0
  %947 = vmatpush1.msra.mxu0 %v921
  %948 = vmatprep.subr.mxu0 0.0
  %949 = vmatpush1.msra.mxu0 %v920
  %950 = vmatprep.subr.mxu0 0.0
  %951 = vmatpush1.msra.mxu0 %v919
  %952 = vmatprep.subr.mxu0 0.0
  %953 = vmatpush1.msra.mxu0 %v918
  %954 = vmatprep.subr.mxu0 0.0
  %955 = vmatpush1.msra.mxu0 %v917
  %956 = vmatprep.subr.mxu0 0.0
  %957 = vmatpush1.msra.mxu0 %v916
  %958 = vmatprep.subr.mxu0 0.0
  %959 = vmatpush1.msra.mxu0 %v915
  %960 = vmatprep.subr.mxu0 0.0
  %961 = vmatpush1.msra.mxu0 %v914
  %962 = vmatprep.subr.mxu0 0.0
  %963 = vmatpush2.msra.mxu0 0.0
  %964 = vmatprep.subr.mxu0 0.0
  %965 = vmatpush2.msra.mxu0 0.0
  %966 = vmatprep.subr.mxu0 0.0
  %967 = vmatpush2.msra.mxu0 0.0
  %968 = vmatprep.subr.mxu0 0.0
  %969 = vmatpush2.msra.mxu0 0.0
  %970 = vmatprep.subr.mxu0 0.0
  %971 = vmatpush2.msra.mxu0 0.0
  %972 = vmatprep.subr.mxu0 0.0
  %973 = vmatpush2.msra.mxu0 0.0
  %974 = vmatprep.subr.mxu0 0.0
  %975 = vmatpush2.msra.mxu0 0.0
  %976 = vmatprep.subr.mxu0 0.0
  %977 = vmatpush2.msra.mxu0 0.0
  %978 = vmatprep.subr.mxu0 0.0
  %979 = vmatpush2.msra.mxu0 0.0
  %980 = vmatprep.subr.mxu0 0.0
  %981 = vmatpush2.msra.mxu0 0.0
  %982 = vmatprep.subr.mxu0 0.0
  %983 = vmatpush2.msra.mxu0 0.0
  %984 = vmatprep.subr.mxu0 0.0
  %985 = vmatpush2.msra.mxu0 0.0
  %986 = vmatprep.subr.mxu0 0.0
  %987 = vmatpush2.msra.mxu0 0.0
  %988 = vmatprep.subr.mxu0 0.0
  %989 = vmatpush2.msra.mxu0 0.0
  %990 = vmatprep.subr.mxu0 0.0
  %991 = vmatpush2.msra.mxu0 0.0
  %992 = vmatprep.subr.mxu0 0.0
  %993 = vmatpush2.msra.mxu0 0.0
  %994 = vmatprep.mubr.f32.mxu0 0.0
  %995 = vmatmul.mubr.f32.gmra.mxu0 %v882
  %v996 = vpop.f32.mrf.mxu0
  %v997 = vadd.f32 0.0, %v996
  %v998 = vpop.f32.mrf.mxu0
  %999 = vmatprep.mubr.f32.mxu0 0.0
  %1000 = vmatmul.mubr.f32.gmra.mxu0 %v883
  %v1001 = vpop.f32.mrf.mxu0
  %v1002 = vadd.f32 0.0, %v1001
  %v1003 = vpop.f32.mrf.mxu0
  %1004 = vmatprep.mubr.f32.mxu0 0.0
  %1005 = vmatmul.mubr.f32.gmra.mxu0 %v884
  %v1006 = vpop.f32.mrf.mxu0
  %v1007 = vadd.f32 0.0, %v1006
  %v1008 = vpop.f32.mrf.mxu0
  %1009 = vmatprep.mubr.f32.mxu0 0.0
  %1010 = vmatmul.mubr.f32.gmra.mxu0 %v885
  %v1011 = vpop.f32.mrf.mxu0
  %v1012 = vadd.f32 0.0, %v1011
  %v1013 = vpop.f32.mrf.mxu0
  %1014 = vmatprep.mubr.f32.mxu0 0.0
  %1015 = vmatmul.mubr.f32.gmra.mxu0 %v886
  %v1016 = vpop.f32.mrf.mxu0
  %v1017 = vadd.f32 0.0, %v1016
  %v1018 = vpop.f32.mrf.mxu0
  %1019 = vmatprep.mubr.f32.mxu0 0.0
  %1020 = vmatmul.mubr.f32.gmra.mxu0 %v887
  %v1021 = vpop.f32.mrf.mxu0
  %v1022 = vadd.f32 0.0, %v1021
  %v1023 = vpop.f32.mrf.mxu0
  %1024 = vmatprep.mubr.f32.mxu0 0.0
  %1025 = vmatmul.mubr.f32.gmra.mxu0 %v888
  %v1026 = vpop.f32.mrf.mxu0
  %v1027 = vadd.f32 0.0, %v1026
  %v1028 = vpop.f32.mrf.mxu0
  %1029 = vmatprep.mubr.f32.mxu0 0.0
  %1030 = vmatmul.mubr.f32.gmra.mxu0 %v889
  %v1031 = vpop.f32.mrf.mxu0
  %v1032 = vadd.f32 0.0, %v1031
  %v1033 = vpop.f32.mrf.mxu0
  %1034 = vmatprep.mubr.f32.mxu0 0.0
  %1035 = vmatmul.mubr.f32.gmra.mxu0 %v890
  %v1036 = vpop.f32.mrf.mxu0
  %v1037 = vadd.f32 0.0, %v1036
  %v1038 = vpop.f32.mrf.mxu0
  %1039 = vmatprep.mubr.f32.mxu0 0.0
  %1040 = vmatmul.mubr.f32.gmra.mxu0 %v891
  %v1041 = vpop.f32.mrf.mxu0
  %v1042 = vadd.f32 0.0, %v1041
  %v1043 = vpop.f32.mrf.mxu0
  %1044 = vmatprep.mubr.f32.mxu0 0.0
  %1045 = vmatmul.mubr.f32.gmra.mxu0 %v892
  %v1046 = vpop.f32.mrf.mxu0
  %v1047 = vadd.f32 0.0, %v1046
  %v1048 = vpop.f32.mrf.mxu0
  %1049 = vmatprep.mubr.f32.mxu0 0.0
  %1050 = vmatmul.mubr.f32.gmra.mxu0 %v893
  %v1051 = vpop.f32.mrf.mxu0
  %v1052 = vadd.f32 0.0, %v1051
  %v1053 = vpop.f32.mrf.mxu0
  %1054 = vmatprep.mubr.f32.mxu0 0.0
  %1055 = vmatmul.mubr.f32.gmra.mxu0 %v894
  %v1056 = vpop.f32.mrf.mxu0
  %v1057 = vadd.f32 0.0, %v1056
  %v1058 = vpop.f32.mrf.mxu0
  %1059 = vmatprep.mubr.f32.mxu0 0.0
  %1060 = vmatmul.mubr.f32.gmra.mxu0 %v895
  %v1061 = vpop.f32.mrf.mxu0
  %v1062 = vadd.f32 0.0, %v1061
  %v1063 = vpop.f32.mrf.mxu0
  %1064 = vmatprep.mubr.f32.mxu0 0.0
  %1065 = vmatmul.mubr.f32.gmra.mxu0 %v896
  %v1066 = vpop.f32.mrf.mxu0
  %v1067 = vadd.f32 0.0, %v1066
  %v1068 = vpop.f32.mrf.mxu0
  %1069 = vmatprep.mubr.f32.mxu0 0.0
  %1070 = vmatmul.mubr.f32.gmra.mxu0 %v897
  %v1071 = vpop.f32.mrf.mxu0
  %v1072 = vadd.f32 0.0, %v1071
  %v1073 = vpop.f32.mrf.mxu0
  %1074 = vdwg.mxu0
  %v1075 = vadd.f32 %v802, %v997
  %v1076 = vadd.f32 %v803, %v1002
  %v1077 = vadd.f32 %v804, %v1007
  %v1078 = vadd.f32 %v805, %v1012
  %v1079 = vadd.f32 %v806, %v1017
  %v1080 = vadd.f32 %v807, %v1022
  %v1081 = vadd.f32 %v808, %v1027
  %v1082 = vadd.f32 %v809, %v1032
  %v1083 = vadd.f32 %v810, %v1037
  %v1084 = vadd.f32 %v811, %v1042
  %v1085 = vadd.f32 %v812, %v1047
  %v1086 = vadd.f32 %v813, %v1052
  %v1087 = vadd.f32 %v814, %v1057
  %v1088 = vadd.f32 %v815, %v1062
  %v1089 = vadd.f32 %v816, %v1067
  %v1090 = vadd.f32 %v817, %v1072
  %v1091 = vld [vmem:[%s2] sm:$0xff]
  %v1092 = vld [vmem:[%s2 + $0x8] sm:$0xff]
  %v1093 = vld [vmem:[%s2 + $0x10] sm:$0xff]
  %v1094 = vld [vmem:[%s2 + $0x18] sm:$0xff]
  %v1095 = vld [vmem:[%s2 + $0x20] sm:$0xff]
  %v1096 = vld [vmem:[%s2 + $0x28] sm:$0xff]
  %v1097 = vld [vmem:[%s2 + $0x30] sm:$0xff]
  %v1098 = vld [vmem:[%s2 + $0x38] sm:$0xff]
  %v1099 = vld [vmem:[%s2 + $0x40] sm:$0xff]
  %v1100 = vld [vmem:[%s2 + $0x48] sm:$0xff]
  %v1101 = vld [vmem:[%s2 + $0x50] sm:$0xff]
  %v1102 = vld [vmem:[%s2 + $0x58] sm:$0xff]
  %v1103 = vld [vmem:[%s2 + $0x60] sm:$0xff]
  %v1104 = vld [vmem:[%s2 + $0x68] sm:$0xff]
  %v1105 = vld [vmem:[%s2 + $0x70] sm:$0xff]
  %v1106 = vld [vmem:[%s2 + $0x78] sm:$0xff]
  %1107 = vmatprep.subr.mxu0 0.0
  %1108 = vmatpush1.msra.mxu0 %v1106
  %1109 = vmatprep.subr.mxu0 0.0
  %1110 = vmatpush1.msra.mxu0 %v1105
  %1111 = vmatprep.subr.mxu0 0.0
  %1112 = vmatpush1.msra.mxu0 %v1104
  %1113 = vmatprep.subr.mxu0 0.0
  %1114 = vmatpush1.msra.mxu0 %v1103
  %1115 = vmatprep.subr.mxu0 0.0
  %1116 = vmatpush1.msra.mxu0 %v1102
  %1117 = vmatprep.subr.mxu0 0.0
  %1118 = vmatpush1.msra.mxu0 %v1101
  %1119 = vmatprep.subr.mxu0 0.0
  %1120 = vmatpush1.msra.mxu0 %v1100
  %1121 = vmatprep.subr.mxu0 0.0
  %1122 = vmatpush1.msra.mxu0 %v1099
  %1123 = vmatprep.subr.mxu0 0.0
  %1124 = vmatpush1.msra.mxu0 %v1098
  %1125 = vmatprep.subr.mxu0 0.0
  %1126 = vmatpush1.msra.mxu0 %v1097
  %1127 = vmatprep.subr.mxu0 0.0
  %1128 = vmatpush1.msra.mxu0 %v1096
  %1129 = vmatprep.subr.mxu0 0.0
  %1130 = vmatpush1.msra.mxu0 %v1095
  %1131 = vmatprep.subr.mxu0 0.0
  %1132 = vmatpush1.msra.mxu0 %v1094
  %1133 = vmatprep.subr.mxu0 0.0
  %1134 = vmatpush1.msra.mxu0 %v1093
  %1135 = vmatprep.subr.mxu0 0.0
  %1136 = vmatpush1.msra.mxu0 %v1092
  %1137 = vmatprep.subr.mxu0 0.0
  %1138 = vmatpush1.msra.mxu0 %v1091
  %1139 = vmatprep.subr.mxu0 0.0
  %1140 = vmatpush2.msra.mxu0 0.0
  %1141 = vmatprep.subr.mxu0 0.0
  %1142 = vmatpush2.msra.mxu0 0.0
  %1143 = vmatprep.subr.mxu0 0.0
  %1144 = vmatpush2.msra.mxu0 0.0
  %1145 = vmatprep.subr.mxu0 0.0
  %1146 = vmatpush2.msra.mxu0 0.0
  %1147 = vmatprep.subr.mxu0 0.0
  %1148 = vmatpush2.msra.mxu0 0.0
  %1149 = vmatprep.subr.mxu0 0.0
  %1150 = vmatpush2.msra.mxu0 0.0
  %1151 = vmatprep.subr.mxu0 0.0
  %1152 = vmatpush2.msra.mxu0 0.0
  %1153 = vmatprep.subr.mxu0 0.0
  %1154 = vmatpush2.msra.mxu0 0.0
  %1155 = vmatprep.subr.mxu0 0.0
  %1156 = vmatpush2.msra.mxu0 0.0
  %1157 = vmatprep.subr.mxu0 0.0
  %1158 = vmatpush2.msra.mxu0 0.0
  %1159 = vmatprep.subr.mxu0 0.0
  %1160 = vmatpush2.msra.mxu0 0.0
  %1161 = vmatprep.subr.mxu0 0.0
  %1162 = vmatpush2.msra.mxu0 0.0
  %1163 = vmatprep.subr.mxu0 0.0
  %1164 = vmatpush2.msra.mxu0 0.0
  %1165 = vmatprep.subr.mxu0 0.0
  %1166 = vmatpush2.msra.mxu0 0.0
  %1167 = vmatprep.subr.mxu0 0.0
  %1168 = vmatpush2.msra.mxu0 0.0
  %1169 = vmatprep.subr.mxu0 0.0
  %1170 = vmatpush2.msra.mxu0 0.0
  %1171 = vmatprep.mubr.f32.mxu0 0.0
  %1172 = vmatmul.mubr.f32.gmra.mxu0 %v898
  %v1173 = vpop.f32.mrf.mxu0
  %v1174 = vadd.f32 0.0, %v1173
  %v1175 = vpop.f32.mrf.mxu0
  %1176 = vmatprep.mubr.f32.mxu0 0.0
  %1177 = vmatmul.mubr.f32.gmra.mxu0 %v899
  %v1178 = vpop.f32.mrf.mxu0
  %v1179 = vadd.f32 0.0, %v1178
  %v1180 = vpop.f32.mrf.mxu0
  %1181 = vmatprep.mubr.f32.mxu0 0.0
  %1182 = vmatmul.mubr.f32.gmra.mxu0 %v900
  %v1183 = vpop.f32.mrf.mxu0
  %v1184 = vadd.f32 0.0, %v1183
  %v1185 = vpop.f32.mrf.mxu0
  %1186 = vmatprep.mubr.f32.mxu0 0.0
  %1187 = vmatmul.mubr.f32.gmra.mxu0 %v901
  %v1188 = vpop.f32.mrf.mxu0
  %v1189 = vadd.f32 0.0, %v1188
  %v1190 = vpop.f32.mrf.mxu0
  %1191 = vmatprep.mubr.f32.mxu0 0.0
  %1192 = vmatmul.mubr.f32.gmra.mxu0 %v902
  %v1193 = vpop.f32.mrf.mxu0
  %v1194 = vadd.f32 0.0, %v1193
  %v1195 = vpop.f32.mrf.mxu0
  %1196 = vmatprep.mubr.f32.mxu0 0.0
  %1197 = vmatmul.mubr.f32.gmra.mxu0 %v903
  %v1198 = vpop.f32.mrf.mxu0
  %v1199 = vadd.f32 0.0, %v1198
  %v1200 = vpop.f32.mrf.mxu0
  %1201 = vmatprep.mubr.f32.mxu0 0.0
  %1202 = vmatmul.mubr.f32.gmra.mxu0 %v904
  %v1203 = vpop.f32.mrf.mxu0
  %v1204 = vadd.f32 0.0, %v1203
  %v1205 = vpop.f32.mrf.mxu0
  %1206 = vmatprep.mubr.f32.mxu0 0.0
  %1207 = vmatmul.mubr.f32.gmra.mxu0 %v905
  %v1208 = vpop.f32.mrf.mxu0
  %v1209 = vadd.f32 0.0, %v1208
  %v1210 = vpop.f32.mrf.mxu0
  %1211 = vmatprep.mubr.f32.mxu0 0.0
  %1212 = vmatmul.mubr.f32.gmra.mxu0 %v906
  %v1213 = vpop.f32.mrf.mxu0
  %v1214 = vadd.f32 0.0, %v1213
  %v1215 = vpop.f32.mrf.mxu0
  %1216 = vmatprep.mubr.f32.mxu0 0.0
  %1217 = vmatmul.mubr.f32.gmra.mxu0 %v907
  %v1218 = vpop.f32.mrf.mxu0
  %v1219 = vadd.f32 0.0, %v1218
  %v1220 = vpop.f32.mrf.mxu0
  %1221 = vmatprep.mubr.f32.mxu0 0.0
  %1222 = vmatmul.mubr.f32.gmra.mxu0 %v908
  %v1223 = vpop.f32.mrf.mxu0
  %v1224 = vadd.f32 0.0, %v1223
  %v1225 = vpop.f32.mrf.mxu0
  %1226 = vmatprep.mubr.f32.mxu0 0.0
  %1227 = vmatmul.mubr.f32.gmra.mxu0 %v909
  %v1228 = vpop.f32.mrf.mxu0
  %v1229 = vadd.f32 0.0, %v1228
  %v1230 = vpop.f32.mrf.mxu0
  %1231 = vmatprep.mubr.f32.mxu0 0.0
  %1232 = vmatmul.mubr.f32.gmra.mxu0 %v910
  %v1233 = vpop.f32.mrf.mxu0
  %v1234 = vadd.f32 0.0, %v1233
  %v1235 = vpop.f32.mrf.mxu0
  %1236 = vmatprep.mubr.f32.mxu0 0.0
  %1237 = vmatmul.mubr.f32.gmra.mxu0 %v911
  %v1238 = vpop.f32.mrf.mxu0
  %v1239 = vadd.f32 0.0, %v1238
  %v1240 = vpop.f32.mrf.mxu0
  %1241 = vmatprep.mubr.f32.mxu0 0.0
  %1242 = vmatmul.mubr.f32.gmra.mxu0 %v912
  %v1243 = vpop.f32.mrf.mxu0
  %v1244 = vadd.f32 0.0, %v1243
  %v1245 = vpop.f32.mrf.mxu0
  %1246 = vmatprep.mubr.f32.mxu0 0.0
  %1247 = vmatmul.mubr.f32.gmra.mxu0 %v913
  %v1248 = vpop.f32.mrf.mxu0
  %v1249 = vadd.f32 0.0, %v1248
  %v1250 = vpop.f32.mrf.mxu0
  %1251 = vdwg.mxu0
  %v1252 = vld [vmem:[%s3] sm:$0xff]
  %v1253 = vld [vmem:[%s3 + $0x8] sm:$0xff]
  %v1254 = vld [vmem:[%s3 + $0x10] sm:$0xff]
  %v1255 = vld [vmem:[%s3 + $0x18] sm:$0xff]
  %v1256 = vld [vmem:[%s3 + $0x20] sm:$0xff]
  %v1257 = vld [vmem:[%s3 + $0x28] sm:$0xff]
  %v1258 = vld [vmem:[%s3 + $0x30] sm:$0xff]
  %v1259 = vld [vmem:[%s3 + $0x38] sm:$0xff]
  %v1260 = vld [vmem:[%s3 + $0x40] sm:$0xff]
  %v1261 = vld [vmem:[%s3 + $0x48] sm:$0xff]
  %v1262 = vld [vmem:[%s3 + $0x50] sm:$0xff]
  %v1263 = vld [vmem:[%s3 + $0x58] sm:$0xff]
  %v1264 = vld [vmem:[%s3 + $0x60] sm:$0xff]
  %v1265 = vld [vmem:[%s3 + $0x68] sm:$0xff]
  %v1266 = vld [vmem:[%s3 + $0x70] sm:$0xff]
  %v1267 = vld [vmem:[%s3 + $0x78] sm:$0xff]
  %1268 = vmatprep.subr.mxu0 0.0
  %1269 = vmatpush1.msra.mxu0 %v1267
  %1270 = vmatprep.subr.mxu0 0.0
  %1271 = vmatpush1.msra.mxu0 %v1266
  %1272 = vmatprep.subr.mxu0 0.0
  %1273 = vmatpush1.msra.mxu0 %v1265
  %1274 = vmatprep.subr.mxu0 0.0
  %1275 = vmatpush1.msra.mxu0 %v1264
  %1276 = vmatprep.subr.mxu0 0.0
  %1277 = vmatpush1.msra.mxu0 %v1263
  %1278 = vmatprep.subr.mxu0 0.0
  %1279 = vmatpush1.msra.mxu0 %v1262
  %1280 = vmatprep.subr.mxu0 0.0
  %1281 = vmatpush1.msra.mxu0 %v1261
  %1282 = vmatprep.subr.mxu0 0.0
  %1283 = vmatpush1.msra.mxu0 %v1260
  %1284 = vmatprep.subr.mxu0 0.0
  %1285 = vmatpush1.msra.mxu0 %v1259
  %1286 = vmatprep.subr.mxu0 0.0
  %1287 = vmatpush1.msra.mxu0 %v1258
  %1288 = vmatprep.subr.mxu0 0.0
  %1289 = vmatpush1.msra.mxu0 %v1257
  %1290 = vmatprep.subr.mxu0 0.0
  %1291 = vmatpush1.msra.mxu0 %v1256
  %1292 = vmatprep.subr.mxu0 0.0
  %1293 = vmatpush1.msra.mxu0 %v1255
  %1294 = vmatprep.subr.mxu0 0.0
  %1295 = vmatpush1.msra.mxu0 %v1254
  %1296 = vmatprep.subr.mxu0 0.0
  %1297 = vmatpush1.msra.mxu0 %v1253
  %1298 = vmatprep.subr.mxu0 0.0
  %1299 = vmatpush1.msra.mxu0 %v1252
  %1300 = vmatprep.subr.mxu0 0.0
  %1301 = vmatpush2.msra.mxu0 0.0
  %1302 = vmatprep.subr.mxu0 0.0
  %1303 = vmatpush2.msra.mxu0 0.0
  %1304 = vmatprep.subr.mxu0 0.0
  %1305 = vmatpush2.msra.mxu0 0.0
  %1306 = vmatprep.subr.mxu0 0.0
  %1307 = vmatpush2.msra.mxu0 0.0
  %1308 = vmatprep.subr.mxu0 0.0
  %1309 = vmatpush2.msra.mxu0 0.0
  %1310 = vmatprep.subr.mxu0 0.0
  %1311 = vmatpush2.msra.mxu0 0.0
  %1312 = vmatprep.subr.mxu0 0.0
  %1313 = vmatpush2.msra.mxu0 0.0
  %1314 = vmatprep.subr.mxu0 0.0
  %1315 = vmatpush2.msra.mxu0 0.0
  %1316 = vmatprep.subr.mxu0 0.0
  %1317 = vmatpush2.msra.mxu0 0.0
  %1318 = vmatprep.subr.mxu0 0.0
  %1319 = vmatpush2.msra.mxu0 0.0
  %1320 = vmatprep.subr.mxu0 0.0
  %1321 = vmatpush2.msra.mxu0 0.0
  %1322 = vmatprep.subr.mxu0 0.0
  %1323 = vmatpush2.msra.mxu0 0.0
  %1324 = vmatprep.subr.mxu0 0.0
  %1325 = vmatpush2.msra.mxu0 0.0
  %1326 = vmatprep.subr.mxu0 0.0
  %1327 = vmatpush2.msra.mxu0 0.0
  %1328 = vmatprep.subr.mxu0 0.0
  %1329 = vmatpush2.msra.mxu0 0.0
  %1330 = vmatprep.subr.mxu0 0.0
  %1331 = vmatpush2.msra.mxu0 0.0
  %1332 = vmatprep.mubr.f32.mxu0 0.0
  %1333 = vmatmul.mubr.f32.gmra.mxu0 %v898
  %v1334 = vpop.f32.mrf.mxu0
  %v1335 = vadd.f32 0.0, %v1334
  %v1336 = vpop.f32.mrf.mxu0
  %1337 = vmatprep.mubr.f32.mxu0 0.0
  %1338 = vmatmul.mubr.f32.gmra.mxu0 %v899
  %v1339 = vpop.f32.mrf.mxu0
  %v1340 = vadd.f32 0.0, %v1339
  %v1341 = vpop.f32.mrf.mxu0
  %1342 = vmatprep.mubr.f32.mxu0 0.0
  %1343 = vmatmul.mubr.f32.gmra.mxu0 %v900
  %v1344 = vpop.f32.mrf.mxu0
  %v1345 = vadd.f32 0.0, %v1344
  %v1346 = vpop.f32.mrf.mxu0
  %1347 = vmatprep.mubr.f32.mxu0 0.0
  %1348 = vmatmul.mubr.f32.gmra.mxu0 %v901
  %v1349 = vpop.f32.mrf.mxu0
  %v1350 = vadd.f32 0.0, %v1349
  %v1351 = vpop.f32.mrf.mxu0
  %1352 = vmatprep.mubr.f32.mxu0 0.0
  %1353 = vmatmul.mubr.f32.gmra.mxu0 %v902
  %v1354 = vpop.f32.mrf.mxu0
  %v1355 = vadd.f32 0.0, %v1354
  %v1356 = vpop.f32.mrf.mxu0
  %1357 = vmatprep.mubr.f32.mxu0 0.0
  %1358 = vmatmul.mubr.f32.gmra.mxu0 %v903
  %v1359 = vpop.f32.mrf.mxu0
  %v1360 = vadd.f32 0.0, %v1359
  %v1361 = vpop.f32.mrf.mxu0
  %1362 = vmatprep.mubr.f32.mxu0 0.0
  %1363 = vmatmul.mubr.f32.gmra.mxu0 %v904
  %v1364 = vpop.f32.mrf.mxu0
  %v1365 = vadd.f32 0.0, %v1364
  %v1366 = vpop.f32.mrf.mxu0
  %1367 = vmatprep.mubr.f32.mxu0 0.0
  %1368 = vmatmul.mubr.f32.gmra.mxu0 %v905
  %v1369 = vpop.f32.mrf.mxu0
  %v1370 = vadd.f32 0.0, %v1369
  %v1371 = vpop.f32.mrf.mxu0
  %1372 = vmatprep.mubr.f32.mxu0 0.0
  %1373 = vmatmul.mubr.f32.gmra.mxu0 %v906
  %v1374 = vpop.f32.mrf.mxu0
  %v1375 = vadd.f32 0.0, %v1374
  %v1376 = vpop.f32.mrf.mxu0
  %1377 = vmatprep.mubr.f32.mxu0 0.0
  %1378 = vmatmul.mubr.f32.gmra.mxu0 %v907
  %v1379 = vpop.f32.mrf.mxu0
  %v1380 = vadd.f32 0.0, %v1379
  %v1381 = vpop.f32.mrf.mxu0
  %1382 = vmatprep.mubr.f32.mxu0 0.0
  %1383 = vmatmul.mubr.f32.gmra.mxu0 %v908
  %v1384 = vpop.f32.mrf.mxu0
  %v1385 = vadd.f32 0.0, %v1384
  %v1386 = vpop.f32.mrf.mxu0
  %1387 = vmatprep.mubr.f32.mxu0 0.0
  %1388 = vmatmul.mubr.f32.gmra.mxu0 %v909
  %v1389 = vpop.f32.mrf.mxu0
  %v1390 = vadd.f32 0.0, %v1389
  %v1391 = vpop.f32.mrf.mxu0
  %1392 = vmatprep.mubr.f32.mxu0 0.0
  %1393 = vmatmul.mubr.f32.gmra.mxu0 %v910
  %v1394 = vpop.f32.mrf.mxu0
  %v1395 = vadd.f32 0.0, %v1394
  %v1396 = vpop.f32.mrf.mxu0
  %1397 = vmatprep.mubr.f32.mxu0 0.0
  %1398 = vmatmul.mubr.f32.gmra.mxu0 %v911
  %v1399 = vpop.f32.mrf.mxu0
  %v1400 = vadd.f32 0.0, %v1399
  %v1401 = vpop.f32.mrf.mxu0
  %1402 = vmatprep.mubr.f32.mxu0 0.0
  %1403 = vmatmul.mubr.f32.gmra.mxu0 %v912
  %v1404 = vpop.f32.mrf.mxu0
  %v1405 = vadd.f32 0.0, %v1404
  %v1406 = vpop.f32.mrf.mxu0
  %1407 = vmatprep.mubr.f32.mxu0 0.0
  %1408 = vmatmul.mubr.f32.gmra.mxu0 %v913
  %v1409 = vpop.f32.mrf.mxu0
  %v1410 = vadd.f32 0.0, %v1409
  %v1411 = vpop.f32.mrf.mxu0
  %1412 = vdwg.mxu0
  %v1413 = vmul.f32 %v1174, %v1174
  %v1414 = vmul.f32 %v1179, %v1179
  %v1415 = vmul.f32 %v1184, %v1184
  %v1416 = vmul.f32 %v1189, %v1189
  %v1417 = vmul.f32 %v1194, %v1194
  %v1418 = vmul.f32 %v1199, %v1199
  %v1419 = vmul.f32 %v1204, %v1204
  %v1420 = vmul.f32 %v1209, %v1209
  %v1421 = vmul.f32 %v1214, %v1214
  %v1422 = vmul.f32 %v1219, %v1219
  %v1423 = vmul.f32 %v1224, %v1224
  %v1424 = vmul.f32 %v1229, %v1229
  %v1425 = vmul.f32 %v1234, %v1234
  %v1426 = vmul.f32 %v1239, %v1239
  %v1427 = vmul.f32 %v1244, %v1244
  %v1428 = vmul.f32 %v1249, %v1249
  %vm1429 = vcmask 130048
  %v1430 = vsel %vm1429, %v1413, 0.0
  %1431 = vadd.xlane.f32.xlu0 %v1430
  %v1432 = vpop.xlane.xlu0 %1431
  %v1433 = vsel %vm1429, %v1414, 0.0
  %1434 = vadd.xlane.f32.xlu0 %v1433
  %v1435 = vpop.xlane.xlu0 %1434
  %v1436 = vsel %vm1429, %v1415, 0.0
  %1437 = vadd.xlane.f32.xlu0 %v1436
  %v1438 = vpop.xlane.xlu0 %1437
  %v1439 = vsel %vm1429, %v1416, 0.0
  %1440 = vadd.xlane.f32.xlu0 %v1439
  %v1441 = vpop.xlane.xlu0 %1440
  %v1442 = vsel %vm1429, %v1417, 0.0
  %1443 = vadd.xlane.f32.xlu0 %v1442
  %v1444 = vpop.xlane.xlu0 %1443
  %v1445 = vsel %vm1429, %v1418, 0.0
  %1446 = vadd.xlane.f32.xlu0 %v1445
  %v1447 = vpop.xlane.xlu0 %1446
  %v1448 = vsel %vm1429, %v1419, 0.0
  %1449 = vadd.xlane.f32.xlu0 %v1448
  %v1450 = vpop.xlane.xlu0 %1449
  %v1451 = vsel %vm1429, %v1420, 0.0
  %1452 = vadd.xlane.f32.xlu0 %v1451
  %v1453 = vpop.xlane.xlu0 %1452
  %v1454 = vsel %vm1429, %v1421, 0.0
  %1455 = vadd.xlane.f32.xlu0 %v1454
  %v1456 = vpop.xlane.xlu0 %1455
  %v1457 = vsel %vm1429, %v1422, 0.0
  %1458 = vadd.xlane.f32.xlu0 %v1457
  %v1459 = vpop.xlane.xlu0 %1458
  %v1460 = vsel %vm1429, %v1423, 0.0
  %1461 = vadd.xlane.f32.xlu0 %v1460
  %v1462 = vpop.xlane.xlu0 %1461
  %v1463 = vsel %vm1429, %v1424, 0.0
  %1464 = vadd.xlane.f32.xlu0 %v1463
  %v1465 = vpop.xlane.xlu0 %1464
  %v1466 = vsel %vm1429, %v1425, 0.0
  %1467 = vadd.xlane.f32.xlu0 %v1466
  %v1468 = vpop.xlane.xlu0 %1467
  %v1469 = vsel %vm1429, %v1426, 0.0
  %1470 = vadd.xlane.f32.xlu0 %v1469
  %v1471 = vpop.xlane.xlu0 %1470
  %v1472 = vsel %vm1429, %v1427, 0.0
  %1473 = vadd.xlane.f32.xlu0 %v1472
  %v1474 = vpop.xlane.xlu0 %1473
  %v1475 = vsel %vm1429, %v1428, 0.0
  %1476 = vadd.xlane.f32.xlu0 %v1475
  %v1477 = vpop.xlane.xlu0 %1476
  %v1478 = vsub.f32 %v1432, %v1335
  %v1479 = vsub.f32 %v1435, %v1340
  %v1480 = vsub.f32 %v1438, %v1345
  %v1481 = vsub.f32 %v1441, %v1350
  %v1482 = vsub.f32 %v1444, %v1355
  %v1483 = vsub.f32 %v1447, %v1360
  %v1484 = vsub.f32 %v1450, %v1365
  %v1485 = vsub.f32 %v1453, %v1370
  %v1486 = vsub.f32 %v1456, %v1375
  %v1487 = vsub.f32 %v1459, %v1380
  %v1488 = vsub.f32 %v1462, %v1385
  %v1489 = vsub.f32 %v1465, %v1390
  %v1490 = vsub.f32 %v1468, %v1395
  %v1491 = vsub.f32 %v1471, %v1400
  %v1492 = vsub.f32 %v1474, %v1405
  %v1493 = vsub.f32 %v1477, %v1410
  %v1494 = vmul.f32 %v1478, 0.5
  %v1495 = vmul.f32 %v1479, 0.5
  %v1496 = vmul.f32 %v1480, 0.5
  %v1497 = vmul.f32 %v1481, 0.5
  %v1498 = vmul.f32 %v1482, 0.5
  %v1499 = vmul.f32 %v1483, 0.5
  %v1500 = vmul.f32 %v1484, 0.5
  %v1501 = vmul.f32 %v1485, 0.5
  %v1502 = vmul.f32 %v1486, 0.5
  %v1503 = vmul.f32 %v1487, 0.5
  %v1504 = vmul.f32 %v1488, 0.5
  %v1505 = vmul.f32 %v1489, 0.5
  %v1506 = vmul.f32 %v1490, 0.5
  %v1507 = vmul.f32 %v1491, 0.5
  %v1508 = vmul.f32 %v1492, 0.5
  %v1509 = vmul.f32 %v1493, 0.5
  %v1510 = vld [vmem:[%s4] sm:$0x1]
  %v1512 = vlaneseq
  %v1513 = vshrl.u32 %v1512, 7
  %v1514 = vsub.s32 0, %v1513
  %v1515 = vrot.slane %v1510, %v1514
  %v1517 = vadd.f32 %v1075, %v1515
  %v1518 = vadd.f32 %v1076, %v1515
  %v1519 = vadd.f32 %v1077, %v1515
  %v1520 = vadd.f32 %v1078, %v1515
  %v1521 = vadd.f32 %v1079, %v1515
  %v1522 = vadd.f32 %v1080, %v1515
  %v1523 = vadd.f32 %v1081, %v1515
  %v1524 = vadd.f32 %v1082, %v1515
  %v1525 = vadd.f32 %v1083, %v1515
  %v1526 = vadd.f32 %v1084, %v1515
  %v1527 = vadd.f32 %v1085, %v1515
  %v1528 = vadd.f32 %v1086, %v1515
  %v1529 = vadd.f32 %v1087, %v1515
  %v1530 = vadd.f32 %v1088, %v1515
  %v1531 = vadd.f32 %v1089, %v1515
  %v1532 = vadd.f32 %v1090, %v1515
  %v1533 = vmax.f32 %v1517, 0.0
  %v1534 = vmax.f32 %v1518, 0.0
  %v1535 = vmax.f32 %v1519, 0.0
  %v1536 = vmax.f32 %v1520, 0.0
  %v1537 = vmax.f32 %v1521, 0.0
  %v1538 = vmax.f32 %v1522, 0.0
  %v1539 = vmax.f32 %v1523, 0.0
  %v1540 = vmax.f32 %v1524, 0.0
  %v1541 = vmax.f32 %v1525, 0.0
  %v1542 = vmax.f32 %v1526, 0.0
  %v1543 = vmax.f32 %v1527, 0.0
  %v1544 = vmax.f32 %v1528, 0.0
  %v1545 = vmax.f32 %v1529, 0.0
  %v1546 = vmax.f32 %v1530, 0.0
  %v1547 = vmax.f32 %v1531, 0.0
  %v1548 = vmax.f32 %v1532, 0.0
  %v1549 = vld [vmem:[%s5] sm:$0xff]
  %v1550 = vld [vmem:[%s5 + $0x8] sm:$0xff]
  %v1551 = vld [vmem:[%s5 + $0x10] sm:$0xff]
  %v1552 = vld [vmem:[%s5 + $0x18] sm:$0xff]
  %v1553 = vld [vmem:[%s6] sm:$0x1]
  %v1555 = vlaneseq
  %v1556 = vshrl.u32 %v1555, 7
  %v1557 = vsub.s32 0, %v1556
  %v1558 = vrot.slane %v1553, %v1557
  %vm1560 = vcmask 261120
  %v1562 = vsel %vm1560, %v1533, 0
  %v1565 = vsel %vm1560, %v1534, 0
  %v1568 = vsel %vm1560, %v1535, 0
  %v1571 = vsel %vm1560, %v1536, 0
  %v1574 = vsel %vm1560, %v1537, 0
  %v1577 = vsel %vm1560, %v1538, 0
  %v1580 = vsel %vm1560, %v1539, 0
  %v1583 = vsel %vm1560, %v1540, 0
  %v1586 = vsel %vm1560, %v1541, 0
  %v1589 = vsel %vm1560, %v1542, 0
  %v1592 = vsel %vm1560, %v1543, 0
  %v1595 = vsel %vm1560, %v1544, 0
  %v1598 = vsel %vm1560, %v1545, 0
  %v1601 = vsel %vm1560, %v1546, 0
  %v1604 = vsel %vm1560, %v1547, 0
  %v1607 = vsel %vm1560, %v1548, 0
  %1609 = vmatprep.subr.mxu0 0.0
  %1610 = vmatpush1.msra.mxu0 0.0
  %1611 = vmatprep.subr.mxu0 0.0
  %1612 = vmatpush1.msra.mxu0 0.0
  %1613 = vmatprep.subr.mxu0 0.0
  %1614 = vmatpush1.msra.mxu0 0.0
  %1615 = vmatprep.subr.mxu0 0.0
  %1616 = vmatpush1.msra.mxu0 0.0
  %1617 = vmatprep.subr.mxu0 0.0
  %1618 = vmatpush1.msra.mxu0 0.0
  %1619 = vmatprep.subr.mxu0 0.0
  %1620 = vmatpush1.msra.mxu0 0.0
  %1621 = vmatprep.subr.mxu0 0.0
  %1622 = vmatpush1.msra.mxu0 0.0
  %1623 = vmatprep.subr.mxu0 0.0
  %1624 = vmatpush1.msra.mxu0 0.0
  %1625 = vmatprep.subr.mxu0 0.0
  %1626 = vmatpush1.msra.mxu0 0.0
  %1627 = vmatprep.subr.mxu0 0.0
  %1628 = vmatpush1.msra.mxu0 0.0
  %1629 = vmatprep.subr.mxu0 0.0
  %1630 = vmatpush1.msra.mxu0 0.0
  %1631 = vmatprep.subr.mxu0 0.0
  %1632 = vmatpush1.msra.mxu0 0.0
  %1633 = vmatprep.subr.mxu0 0.0
  %1634 = vmatpush1.msra.mxu0 %v1552
  %1635 = vmatprep.subr.mxu0 0.0
  %1636 = vmatpush1.msra.mxu0 %v1551
  %1637 = vmatprep.subr.mxu0 0.0
  %1638 = vmatpush1.msra.mxu0 %v1550
  %1639 = vmatprep.subr.mxu0 0.0
  %1640 = vmatpush1.msra.mxu0 %v1549
  %1641 = vmatprep.subr.mxu0 0.0
  %1642 = vmatpush2.msra.mxu0 0.0
  %1643 = vmatprep.subr.mxu0 0.0
  %1644 = vmatpush2.msra.mxu0 0.0
  %1645 = vmatprep.subr.mxu0 0.0
  %1646 = vmatpush2.msra.mxu0 0.0
  %1647 = vmatprep.subr.mxu0 0.0
  %1648 = vmatpush2.msra.mxu0 0.0
  %1649 = vmatprep.subr.mxu0 0.0
  %1650 = vmatpush2.msra.mxu0 0.0
  %1651 = vmatprep.subr.mxu0 0.0
  %1652 = vmatpush2.msra.mxu0 0.0
  %1653 = vmatprep.subr.mxu0 0.0
  %1654 = vmatpush2.msra.mxu0 0.0
  %1655 = vmatprep.subr.mxu0 0.0
  %1656 = vmatpush2.msra.mxu0 0.0
  %1657 = vmatprep.subr.mxu0 0.0
  %1658 = vmatpush2.msra.mxu0 0.0
  %1659 = vmatprep.subr.mxu0 0.0
  %1660 = vmatpush2.msra.mxu0 0.0
  %1661 = vmatprep.subr.mxu0 0.0
  %1662 = vmatpush2.msra.mxu0 0.0
  %1663 = vmatprep.subr.mxu0 0.0
  %1664 = vmatpush2.msra.mxu0 0.0
  %1665 = vmatprep.subr.mxu0 0.0
  %1666 = vmatpush2.msra.mxu0 0.0
  %1667 = vmatprep.subr.mxu0 0.0
  %1668 = vmatpush2.msra.mxu0 0.0
  %1669 = vmatprep.subr.mxu0 0.0
  %1670 = vmatpush2.msra.mxu0 0.0
  %1671 = vmatprep.subr.mxu0 0.0
  %1672 = vmatpush2.msra.mxu0 0.0
  %1673 = vmatprep.mubr.f32.mxu0 0.0
  %1674 = vmatmul.mubr.f32.gmra.mxu0 %v1562
  %v1675 = vpop.f32.mrf.mxu0
  %v1676 = vadd.f32 %v1558, %v1675
  %v1677 = vpop.f32.mrf.mxu0
  %1678 = vmatprep.mubr.f32.mxu0 0.0
  %1679 = vmatmul.mubr.f32.gmra.mxu0 %v1565
  %v1680 = vpop.f32.mrf.mxu0
  %v1681 = vadd.f32 %v1558, %v1680
  %v1682 = vpop.f32.mrf.mxu0
  %1683 = vmatprep.mubr.f32.mxu0 0.0
  %1684 = vmatmul.mubr.f32.gmra.mxu0 %v1568
  %v1685 = vpop.f32.mrf.mxu0
  %v1686 = vadd.f32 %v1558, %v1685
  %v1687 = vpop.f32.mrf.mxu0
  %1688 = vmatprep.mubr.f32.mxu0 0.0
  %1689 = vmatmul.mubr.f32.gmra.mxu0 %v1571
  %v1690 = vpop.f32.mrf.mxu0
  %v1691 = vadd.f32 %v1558, %v1690
  %v1692 = vpop.f32.mrf.mxu0
  %1693 = vmatprep.mubr.f32.mxu0 0.0
  %1694 = vmatmul.mubr.f32.gmra.mxu0 %v1574
  %v1695 = vpop.f32.mrf.mxu0
  %v1696 = vadd.f32 %v1558, %v1695
  %v1697 = vpop.f32.mrf.mxu0
  %1698 = vmatprep.mubr.f32.mxu0 0.0
  %1699 = vmatmul.mubr.f32.gmra.mxu0 %v1577
  %v1700 = vpop.f32.mrf.mxu0
  %v1701 = vadd.f32 %v1558, %v1700
  %v1702 = vpop.f32.mrf.mxu0
  %1703 = vmatprep.mubr.f32.mxu0 0.0
  %1704 = vmatmul.mubr.f32.gmra.mxu0 %v1580
  %v1705 = vpop.f32.mrf.mxu0
  %v1706 = vadd.f32 %v1558, %v1705
  %v1707 = vpop.f32.mrf.mxu0
  %1708 = vmatprep.mubr.f32.mxu0 0.0
  %1709 = vmatmul.mubr.f32.gmra.mxu0 %v1583
  %v1710 = vpop.f32.mrf.mxu0
  %v1711 = vadd.f32 %v1558, %v1710
  %v1712 = vpop.f32.mrf.mxu0
  %1713 = vmatprep.mubr.f32.mxu0 0.0
  %1714 = vmatmul.mubr.f32.gmra.mxu0 %v1586
  %v1715 = vpop.f32.mrf.mxu0
  %v1716 = vadd.f32 %v1558, %v1715
  %v1717 = vpop.f32.mrf.mxu0
  %1718 = vmatprep.mubr.f32.mxu0 0.0
  %1719 = vmatmul.mubr.f32.gmra.mxu0 %v1589
  %v1720 = vpop.f32.mrf.mxu0
  %v1721 = vadd.f32 %v1558, %v1720
  %v1722 = vpop.f32.mrf.mxu0
  %1723 = vmatprep.mubr.f32.mxu0 0.0
  %1724 = vmatmul.mubr.f32.gmra.mxu0 %v1592
  %v1725 = vpop.f32.mrf.mxu0
  %v1726 = vadd.f32 %v1558, %v1725
  %v1727 = vpop.f32.mrf.mxu0
  %1728 = vmatprep.mubr.f32.mxu0 0.0
  %1729 = vmatmul.mubr.f32.gmra.mxu0 %v1595
  %v1730 = vpop.f32.mrf.mxu0
  %v1731 = vadd.f32 %v1558, %v1730
  %v1732 = vpop.f32.mrf.mxu0
  %1733 = vmatprep.mubr.f32.mxu0 0.0
  %1734 = vmatmul.mubr.f32.gmra.mxu0 %v1598
  %v1735 = vpop.f32.mrf.mxu0
  %v1736 = vadd.f32 %v1558, %v1735
  %v1737 = vpop.f32.mrf.mxu0
  %1738 = vmatprep.mubr.f32.mxu0 0.0
  %1739 = vmatmul.mubr.f32.gmra.mxu0 %v1601
  %v1740 = vpop.f32.mrf.mxu0
  %v1741 = vadd.f32 %v1558, %v1740
  %v1742 = vpop.f32.mrf.mxu0
  %1743 = vmatprep.mubr.f32.mxu0 0.0
  %1744 = vmatmul.mubr.f32.gmra.mxu0 %v1604
  %v1745 = vpop.f32.mrf.mxu0
  %v1746 = vadd.f32 %v1558, %v1745
  %v1747 = vpop.f32.mrf.mxu0
  %1748 = vmatprep.mubr.f32.mxu0 0.0
  %1749 = vmatmul.mubr.f32.gmra.mxu0 %v1607
  %v1750 = vpop.f32.mrf.mxu0
  %v1751 = vadd.f32 %v1558, %v1750
  %v1752 = vpop.f32.mrf.mxu0
  %1753 = vdwg.mxu0
  %v1754 = vmax.f32 %v1676, 0.0
  %v1755 = vmax.f32 %v1681, 0.0
  %v1756 = vmax.f32 %v1686, 0.0
  %v1757 = vmax.f32 %v1691, 0.0
  %v1758 = vmax.f32 %v1696, 0.0
  %v1759 = vmax.f32 %v1701, 0.0
  %v1760 = vmax.f32 %v1706, 0.0
  %v1761 = vmax.f32 %v1711, 0.0
  %v1762 = vmax.f32 %v1716, 0.0
  %v1763 = vmax.f32 %v1721, 0.0
  %v1764 = vmax.f32 %v1726, 0.0
  %v1765 = vmax.f32 %v1731, 0.0
  %v1766 = vmax.f32 %v1736, 0.0
  %v1767 = vmax.f32 %v1741, 0.0
  %v1768 = vmax.f32 %v1746, 0.0
  %v1769 = vmax.f32 %v1751, 0.0
  %v1770 = vld [vmem:[%s7] sm:$0x1]
  %v1772 = vlaneseq
  %v1773 = vshrl.u32 %v1772, 7
  %v1774 = vsub.s32 0, %v1773
  %v1775 = vrot.slane %v1770, %v1774
  %v1777 = vmul.f32 %v1754, %v1775
  %v1778 = vmul.f32 %v1755, %v1775
  %v1779 = vmul.f32 %v1756, %v1775
  %v1780 = vmul.f32 %v1757, %v1775
  %v1781 = vmul.f32 %v1758, %v1775
  %v1782 = vmul.f32 %v1759, %v1775
  %v1783 = vmul.f32 %v1760, %v1775
  %v1784 = vmul.f32 %v1761, %v1775
  %v1785 = vmul.f32 %v1762, %v1775
  %v1786 = vmul.f32 %v1763, %v1775
  %v1787 = vmul.f32 %v1764, %v1775
  %v1788 = vmul.f32 %v1765, %v1775
  %v1789 = vmul.f32 %v1766, %v1775
  %v1790 = vmul.f32 %v1767, %v1775
  %v1791 = vmul.f32 %v1768, %v1775
  %v1792 = vmul.f32 %v1769, %v1775
  %v1793 = vsel %vm1560, %v1777, 0.0
  %1794 = vadd.xlane.f32.xlu0 %v1793
  %v1795 = vpop.xlane.xlu0 %1794
  %v1796 = vsel %vm1560, %v1778, 0.0
  %1797 = vadd.xlane.f32.xlu0 %v1796
  %v1798 = vpop.xlane.xlu0 %1797
  %v1799 = vsel %vm1560, %v1779, 0.0
  %1800 = vadd.xlane.f32.xlu0 %v1799
  %v1801 = vpop.xlane.xlu0 %1800
  %v1802 = vsel %vm1560, %v1780, 0.0
  %1803 = vadd.xlane.f32.xlu0 %v1802
  %v1804 = vpop.xlane.xlu0 %1803
  %v1805 = vsel %vm1560, %v1781, 0.0
  %1806 = vadd.xlane.f32.xlu0 %v1805
  %v1807 = vpop.xlane.xlu0 %1806
  %v1808 = vsel %vm1560, %v1782, 0.0
  %1809 = vadd.xlane.f32.xlu0 %v1808
  %v1810 = vpop.xlane.xlu0 %1809
  %v1811 = vsel %vm1560, %v1783, 0.0
  %1812 = vadd.xlane.f32.xlu0 %v1811
  %v1813 = vpop.xlane.xlu0 %1812
  %v1814 = vsel %vm1560, %v1784, 0.0
  %1815 = vadd.xlane.f32.xlu0 %v1814
  %v1816 = vpop.xlane.xlu0 %1815
  %v1817 = vsel %vm1560, %v1785, 0.0
  %1818 = vadd.xlane.f32.xlu0 %v1817
  %v1819 = vpop.xlane.xlu0 %1818
  %v1820 = vsel %vm1560, %v1786, 0.0
  %1821 = vadd.xlane.f32.xlu0 %v1820
  %v1822 = vpop.xlane.xlu0 %1821
  %v1823 = vsel %vm1560, %v1787, 0.0
  %1824 = vadd.xlane.f32.xlu0 %v1823
  %v1825 = vpop.xlane.xlu0 %1824
  %v1826 = vsel %vm1560, %v1788, 0.0
  %1827 = vadd.xlane.f32.xlu0 %v1826
  %v1828 = vpop.xlane.xlu0 %1827
  %v1829 = vsel %vm1560, %v1789, 0.0
  %1830 = vadd.xlane.f32.xlu0 %v1829
  %v1831 = vpop.xlane.xlu0 %1830
  %v1832 = vsel %vm1560, %v1790, 0.0
  %1833 = vadd.xlane.f32.xlu0 %v1832
  %v1834 = vpop.xlane.xlu0 %1833
  %v1835 = vsel %vm1560, %v1791, 0.0
  %1836 = vadd.xlane.f32.xlu0 %v1835
  %v1837 = vpop.xlane.xlu0 %1836
  %v1838 = vsel %vm1560, %v1792, 0.0
  %1839 = vadd.xlane.f32.xlu0 %v1838
  %v1840 = vpop.xlane.xlu0 %1839
  %1857 = vrot.lane.b32.xlu0 %v1335, 127
  %v1858 = vpop.permute.xlu0 %1857
  %1859 = vrot.lane.b32.xlu0 %v1340, 127
  %v1860 = vpop.permute.xlu0 %1859
  %1861 = vrot.lane.b32.xlu0 %v1345, 127
  %v1862 = vpop.permute.xlu0 %1861
  %1863 = vrot.lane.b32.xlu0 %v1350, 127
  %v1864 = vpop.permute.xlu0 %1863
  %1865 = vrot.lane.b32.xlu0 %v1355, 127
  %v1866 = vpop.permute.xlu0 %1865
  %1867 = vrot.lane.b32.xlu0 %v1360, 127
  %v1868 = vpop.permute.xlu0 %1867
  %1869 = vrot.lane.b32.xlu0 %v1365, 127
  %v1870 = vpop.permute.xlu0 %1869
  %1871 = vrot.lane.b32.xlu0 %v1370, 127
  %v1872 = vpop.permute.xlu0 %1871
  %1873 = vrot.lane.b32.xlu0 %v1375, 127
  %v1874 = vpop.permute.xlu0 %1873
  %1875 = vrot.lane.b32.xlu0 %v1380, 127
  %v1876 = vpop.permute.xlu0 %1875
  %1877 = vrot.lane.b32.xlu0 %v1385, 127
  %v1878 = vpop.permute.xlu0 %1877
  %1879 = vrot.lane.b32.xlu0 %v1390, 127
  %v1880 = vpop.permute.xlu0 %1879
  %1881 = vrot.lane.b32.xlu0 %v1395, 127
  %v1882 = vpop.permute.xlu0 %1881
  %1883 = vrot.lane.b32.xlu0 %v1400, 127
  %v1884 = vpop.permute.xlu0 %1883
  %1885 = vrot.lane.b32.xlu0 %v1405, 127
  %v1886 = vpop.permute.xlu0 %1885
  %1887 = vrot.lane.b32.xlu0 %v1410, 127
  %v1888 = vpop.permute.xlu0 %1887
  %v1905 = vadd.f32 %v1494, %v1858
  %v1906 = vadd.f32 %v1495, %v1860
  %v1907 = vadd.f32 %v1496, %v1862
  %v1908 = vadd.f32 %v1497, %v1864
  %v1909 = vadd.f32 %v1498, %v1866
  %v1910 = vadd.f32 %v1499, %v1868
  %v1911 = vadd.f32 %v1500, %v1870
  %v1912 = vadd.f32 %v1501, %v1872
  %v1913 = vadd.f32 %v1502, %v1874
  %v1914 = vadd.f32 %v1503, %v1876
  %v1915 = vadd.f32 %v1504, %v1878
  %v1916 = vadd.f32 %v1505, %v1880
  %v1917 = vadd.f32 %v1506, %v1882
  %v1918 = vadd.f32 %v1507, %v1884
  %v1919 = vadd.f32 %v1508, %v1886
  %v1920 = vadd.f32 %v1509, %v1888
  %v1921 = vadd.f32 %v1905, %v1795
  %v1922 = vadd.f32 %v1906, %v1798
  %v1923 = vadd.f32 %v1907, %v1801
  %v1924 = vadd.f32 %v1908, %v1804
  %v1925 = vadd.f32 %v1909, %v1807
  %v1926 = vadd.f32 %v1910, %v1810
  %v1927 = vadd.f32 %v1911, %v1813
  %v1928 = vadd.f32 %v1912, %v1816
  %v1929 = vadd.f32 %v1913, %v1819
  %v1930 = vadd.f32 %v1914, %v1822
  %v1931 = vadd.f32 %v1915, %v1825
  %v1932 = vadd.f32 %v1916, %v1828
  %v1933 = vadd.f32 %v1917, %v1831
  %v1934 = vadd.f32 %v1918, %v1834
  %v1935 = vadd.f32 %v1919, %v1837
  %v1936 = vadd.f32 %v1920, %v1840
  %v1937 = vxor.u32 %v1921, 2147483648
  %v1938 = vxor.u32 %v1922, 2147483648
  %v1939 = vxor.u32 %v1923, 2147483648
  %v1940 = vxor.u32 %v1924, 2147483648
  %v1941 = vxor.u32 %v1925, 2147483648
  %v1942 = vxor.u32 %v1926, 2147483648
  %v1943 = vxor.u32 %v1927, 2147483648
  %v1944 = vxor.u32 %v1928, 2147483648
  %v1945 = vxor.u32 %v1929, 2147483648
  %v1946 = vxor.u32 %v1930, 2147483648
  %v1947 = vxor.u32 %v1931, 2147483648
  %v1948 = vxor.u32 %v1932, 2147483648
  %v1949 = vxor.u32 %v1933, 2147483648
  %v1950 = vxor.u32 %v1934, 2147483648
  %v1951 = vxor.u32 %v1935, 2147483648
  %v1952 = vxor.u32 %v1936, 2147483648
  %v1953 = vmul.f32 %v1937, 1.442695
  %v1954 = vpow.pop %v1953
  %v1955 = vmul.f32 %v1938, 1.442695
  %v1956 = vpow.pop %v1955
  %v1957 = vmul.f32 %v1939, 1.442695
  %v1958 = vpow.pop %v1957
  %v1959 = vmul.f32 %v1940, 1.442695
  %v1960 = vpow.pop %v1959
  %v1961 = vmul.f32 %v1941, 1.442695
  %v1962 = vpow.pop %v1961
  %v1963 = vmul.f32 %v1942, 1.442695
  %v1964 = vpow.pop %v1963
  %v1965 = vmul.f32 %v1943, 1.442695
  %v1966 = vpow.pop %v1965
  %v1967 = vmul.f32 %v1944, 1.442695
  %v1968 = vpow.pop %v1967
  %v1969 = vmul.f32 %v1945, 1.442695
  %v1970 = vpow.pop %v1969
  %v1971 = vmul.f32 %v1946, 1.442695
  %v1972 = vpow.pop %v1971
  %v1973 = vmul.f32 %v1947, 1.442695
  %v1974 = vpow.pop %v1973
  %v1975 = vmul.f32 %v1948, 1.442695
  %v1976 = vpow.pop %v1975
  %v1977 = vmul.f32 %v1949, 1.442695
  %v1978 = vpow.pop %v1977
  %v1979 = vmul.f32 %v1950, 1.442695
  %v1980 = vpow.pop %v1979
  %v1981 = vmul.f32 %v1951, 1.442695
  %v1982 = vpow.pop %v1981
  %v1983 = vmul.f32 %v1952, 1.442695
  %v1984 = vpow.pop %v1983
  %v1985 = vadd.f32 %v1954, 1.0
  %v1986 = vadd.f32 %v1956, 1.0
  %v1987 = vadd.f32 %v1958, 1.0
  %v1988 = vadd.f32 %v1960, 1.0
  %v1989 = vadd.f32 %v1962, 1.0
  %v1990 = vadd.f32 %v1964, 1.0
  %v1991 = vadd.f32 %v1966, 1.0
  %v1992 = vadd.f32 %v1968, 1.0
  %v1993 = vadd.f32 %v1970, 1.0
  %v1994 = vadd.f32 %v1972, 1.0
  %v1995 = vadd.f32 %v1974, 1.0
  %v1996 = vadd.f32 %v1976, 1.0
  %v1997 = vadd.f32 %v1978, 1.0
  %v1998 = vadd.f32 %v1980, 1.0
  %v1999 = vadd.f32 %v1982, 1.0
  %v2000 = vadd.f32 %v1984, 1.0
  %v2001 = vrcp.pop %v1985
  %v2002 = vmul.f32 1.0, %v2001
  %v2003 = vrcp.pop %v1986
  %v2004 = vmul.f32 1.0, %v2003
  %v2005 = vrcp.pop %v1987
  %v2006 = vmul.f32 1.0, %v2005
  %v2007 = vrcp.pop %v1988
  %v2008 = vmul.f32 1.0, %v2007
  %v2009 = vrcp.pop %v1989
  %v2010 = vmul.f32 1.0, %v2009
  %v2011 = vrcp.pop %v1990
  %v2012 = vmul.f32 1.0, %v2011
  %v2013 = vrcp.pop %v1991
  %v2014 = vmul.f32 1.0, %v2013
  %v2015 = vrcp.pop %v1992
  %v2016 = vmul.f32 1.0, %v2015
  %v2017 = vrcp.pop %v1993
  %v2018 = vmul.f32 1.0, %v2017
  %v2019 = vrcp.pop %v1994
  %v2020 = vmul.f32 1.0, %v2019
  %v2021 = vrcp.pop %v1995
  %v2022 = vmul.f32 1.0, %v2021
  %v2023 = vrcp.pop %v1996
  %v2024 = vmul.f32 1.0, %v2023
  %v2025 = vrcp.pop %v1997
  %v2026 = vmul.f32 1.0, %v2025
  %v2027 = vrcp.pop %v1998
  %v2028 = vmul.f32 1.0, %v2027
  %v2029 = vrcp.pop %v1999
  %v2030 = vmul.f32 1.0, %v2029
  %v2031 = vrcp.pop %v2000
  %v2032 = vmul.f32 1.0, %v2031
  %vm2033 = vcmask 7168
  %2034 = vst.msk [vmem:[%s8] sm:$0xff] %vm2033, %v2002
  %2035 = vst.msk [vmem:[%s8 + $0x8] sm:$0xff] %vm2033, %v2004
  %2036 = vst.msk [vmem:[%s8 + $0x10] sm:$0xff] %vm2033, %v2006
  %2037 = vst.msk [vmem:[%s8 + $0x18] sm:$0xff] %vm2033, %v2008
  %2038 = vst.msk [vmem:[%s8 + $0x20] sm:$0xff] %vm2033, %v2010
  %2039 = vst.msk [vmem:[%s8 + $0x28] sm:$0xff] %vm2033, %v2012
  %2040 = vst.msk [vmem:[%s8 + $0x30] sm:$0xff] %vm2033, %v2014
  %2041 = vst.msk [vmem:[%s8 + $0x38] sm:$0xff] %vm2033, %v2016
  %2042 = vst.msk [vmem:[%s8 + $0x40] sm:$0xff] %vm2033, %v2018
  %2043 = vst.msk [vmem:[%s8 + $0x48] sm:$0xff] %vm2033, %v2020
  %2044 = vst.msk [vmem:[%s8 + $0x50] sm:$0xff] %vm2033, %v2022
  %2045 = vst.msk [vmem:[%s8 + $0x58] sm:$0xff] %vm2033, %v2024
  %2046 = vst.msk [vmem:[%s8 + $0x60] sm:$0xff] %vm2033, %v2026
  %2047 = vst.msk [vmem:[%s8 + $0x68] sm:$0xff] %vm2033, %v2028
  %2048 = vst.msk [vmem:[%s8 + $0x70] sm:$0xff] %vm2033, %v2030
  %2049 = vst.msk [vmem:[%s8 + $0x78] sm:$0xff] %vm2033, %v2032
  // Predicated region
  $region34: #{tpu_custom_call.1} parent=0 // pred_check
    _
  $region35: #{tpu_custom_call.1} parent=0 // pred_check_branch
    %2051 = sbr.rel (0) target = $region37
  $region36: #{tpu_custom_call.1} parent=0 // pred_region
    _
  $region37: #{tpu_custom_call.1} parent=0 // pred_fallthru
    _
  // Predicated region
  $region38: #{tpu_custom_call.1} parent=0 // pred_check
    _
  $region39: #{tpu_custom_call.1} parent=0 // pred_check_branch
    %2053 = sbr.rel (0) target = $region41
  $region40: #{tpu_custom_call.1} parent=0 // pred_region
    _
  $region41: #{tpu_custom_call.1} parent=0 // pred_fallthru
    _

</llo_original>
